<compile_context>
chip_gen: v5e
topology: v5e:2x2
jax: 0.10.0
libtpu: 0.0.40
codegen_flags: <defaults>
</compile_context>

<pallas_src>
import functools

import numpy as np
import jax
import jax.numpy as jnp
from jax import lax
from jax.experimental import pallas as pl
from jax.experimental.pallas import tpu as pltpu


def _lrelu(x, slope=0.1):
    return jnp.where(x >= 0, x, slope * x)


def _spm_kernel(mask_ref, x_ref, ph_ref, pc_ref, wg_ref, bg_ref, woc_ref,
                boc_ref, out_ref, hid_ref, cell_ref, pg_ref, po_ref,
                *, H, W, Ch, Ci):
    # mask_ref: (9, HW)        boundary-validity masks per 3x3 tap
    # x_ref   : (1, Ci, HW)    input_ (flattened NCHW slab)
    # ph_ref  : (1, Ch, HW)    prev_hidden
    # pc_ref  : (1, Ch, HW)    prev_cell
    # wg_ref  : (4*Ch, 9*Cin)  stacked gate weights [Add(2Ch) | Dot(Ch) | Out(Ch)]
    # bg_ref  : (4*Ch, 1)
    # woc_ref : (Ci, 9*Ch)     out_conv weights
    # boc_ref : (Ci, 1)
    # pg_ref  : VMEM scratch (9*Cin, HW)  im2col patches for the gate conv
    # po_ref  : VMEM scratch (9*Ch, HW)   im2col patches for the out_conv
    hw = H * W
    Cin = Ci + Ch
    offsets = [dy * W + dx for dy in (-1, 0, 1) for dx in (-1, 0, 1)]

    # Hoisted mask broadcast: one (Cin, HW) broadcast per non-center tap,
    # reused (top Ch rows) by the hidden-tap pass below.
    mask_b = [None] * 9
    for t, d in enumerate(offsets):
        if d != 0:
            mask_b[t] = jnp.broadcast_to(mask_ref[t:t + 1, :], (Cin, hw))

    # Stack x | prev_h once (sublane-aligned 16+8 concat); weight columns are
    # ordered (tap, [x|h] channel) so this matches directly.
    stacked = jnp.concatenate([x_ref[0], ph_ref[0]], axis=0)        # (Cin, HW)

    # ---- im2col for the gate conv: XLU roll + mask, stored into scratch ----
    for t, d in enumerate(offsets):
        if d == 0:
            pg_ref[t * Cin:(t + 1) * Cin, :] = stacked              # center tap
        else:
            rolled = pltpu.roll(stacked, shift=(-d) % hw, axis=1)
            pg_ref[t * Cin:(t + 1) * Cin, :] = rolled * mask_b[t]

    # ---- gate convolution: one (4Ch, 9*Cin) @ (9*Cin, HW) MXU matmul ----
    acc = jnp.dot(wg_ref[...], pg_ref[...],
                  preferred_element_type=jnp.float32) + bg_ref[...]  # (4Ch, HW)

    # Gate split = aligned sublane slices (Ch rows each).
    in_g   = jax.nn.sigmoid(acc[0 * Ch:1 * Ch])                     # sigmoid(in_gate)
    cell_g = jnp.tanh(acc[1 * Ch:2 * Ch])                           # tanh(cell_gate)
    rem_g  = jax.nn.sigmoid(acc[2 * Ch:3 * Ch])                     # sigmoid(Dot_Gates)
    out_g  = _lrelu(acc[3 * Ch:4 * Ch])                             # lrelu(Out_Gates)

    cell_new = pc_ref[0] + in_g * cell_g                            # (Ch, HW)
    hidden = out_g * jnp.tanh(cell_new)
    cell_out = rem_g * cell_new

    hid_ref[0] = hidden                                             # lane-dense store
    cell_ref[0] = cell_out                                          # lane-dense store

    # ---- fused out_conv on hidden: (Ci, 9*Ch) @ (9*Ch, HW) ----
    for t, d in enumerate(offsets):
        if d == 0:
            po_ref[t * Ch:(t + 1) * Ch, :] = hidden
        else:
            rolled = pltpu.roll(hidden, shift=(-d) % hw, axis=1)
            po_ref[t * Ch:(t + 1) * Ch, :] = rolled * mask_b[t][:Ch, :]

    acc2 = jnp.dot(woc_ref[...], po_ref[...],
                   preferred_element_type=jnp.float32) + boc_ref[...]  # (Ci, HW)
    out_ref[0] = _lrelu(acc2)                                       # lane-dense store


def _oihw_to_mat(w):
    # (Cout, Cin, 3, 3) -> (Cout, 9*Cin); column index = (ky*3+kx)*Cin + cin
    co, ci = w.shape[0], w.shape[1]
    return jnp.transpose(w, (0, 2, 3, 1)).reshape(co, 9 * ci)


def _tap_masks(H, W):
    # (9, H*W) f32: 1.0 where the (dy, dx) neighbour of position p is in-bounds.
    ys, xs = np.meshgrid(np.arange(H), np.arange(W), indexing="ij")
    ys, xs = ys.reshape(-1), xs.reshape(-1)
    rows = []
    for dy in (-1, 0, 1):
        for dx in (-1, 0, 1):
            ok = ((ys + dy >= 0) & (ys + dy < H) &
                  (xs + dx >= 0) & (xs + dx < W))
            rows.append(ok.astype(np.float32))
    return jnp.asarray(np.stack(rows))


@jax.jit
def _spm32c_core(x, prev_h, prev_c, params):
    """SPM_32C forward.  x/prev_h/prev_c are NCHW f32; returns NCHW outputs."""
    B, Ci, H, W = x.shape
    Ch = prev_h.shape[1]
    Cin = Ci + Ch
    hw = H * W
    wg, bg, woc, boc, masks = params

    # Perf-critical layout assumptions (kernel would still be correct without
    # them, but would silently degrade to masked stores / relayouts).
    assert Ci % 8 == 0 and Ch % 8 == 0, "channel counts must be sublane (x8) aligned"
    assert hw % 128 == 0, "H*W must be lane (x128) aligned"

    # Free (row-major) reshapes only -- no transposes, no pads, no HBM concat.
    x_f = x.reshape(B, Ci, hw)
    ph_f = prev_h.reshape(B, Ch, hw)
    pc_f = prev_c.reshape(B, Ch, hw)

    call = pl.pallas_call(
        functools.partial(_spm_kernel, H=H, W=W, Ch=Ch, Ci=Ci),
        grid=(B,),
        in_specs=[
            pl.BlockSpec((9, hw), lambda b: (0, 0)),             # tap masks
            pl.BlockSpec((1, Ci, hw), lambda b: (b, 0, 0)),      # x
            pl.BlockSpec((1, Ch, hw), lambda b: (b, 0, 0)),      # prev_h
            pl.BlockSpec((1, Ch, hw), lambda b: (b, 0, 0)),      # prev_c
            pl.BlockSpec((4 * Ch, 9 * Cin), lambda b: (0, 0)),   # gate weights
            pl.BlockSpec((4 * Ch, 1), lambda b: (0, 0)),         # gate bias
            pl.BlockSpec((Ci, 9 * Ch), lambda b: (0, 0)),        # out_conv weights
            pl.BlockSpec((Ci, 1), lambda b: (0, 0)),             # out_conv bias
        ],
        out_specs=[
            pl.BlockSpec((1, Ci, hw), lambda b: (b, 0, 0)),      # out_h
            pl.BlockSpec((1, Ch, hw), lambda b: (b, 0, 0)),      # hidden
            pl.BlockSpec((1, Ch, hw), lambda b: (b, 0, 0)),      # cell
        ],
        out_shape=[
            jax.ShapeDtypeStruct((B, Ci, hw), jnp.float32),
            jax.ShapeDtypeStruct((B, Ch, hw), jnp.float32),
            jax.ShapeDtypeStruct((B, Ch, hw), jnp.float32),
        ],
        scratch_shapes=[
            pltpu.VMEM((9 * Cin, hw), jnp.float32),              # gate im2col patches
            pltpu.VMEM((9 * Ch, hw), jnp.float32),               # out_conv im2col patches
        ],
        compiler_params=pltpu.CompilerParams(
            dimension_semantics=("parallel",)),
    )
    out_h, hidden, cell = call(masks, x_f, ph_f, pc_f, wg, bg, woc, boc)
    return (out_h.reshape(B, Ci, H, W),
            hidden.reshape(B, Ch, H, W),
            cell.reshape(B, Ch, H, W))


def spm32c_pallas(x, prev_h, prev_c, params):
    if prev_h is None:   # mirrors the module's zero-state branch
        B, _, H, W = x.shape
        Ch = params[1].shape[0] // 4
        prev_h = jnp.zeros((B, Ch, H, W), x.dtype)
        prev_c = jnp.zeros((B, Ch, H, W), x.dtype)
    return _spm32c_core(x, prev_h, prev_c, params)


# ------------------------- pure-JAX reference (NCHW) -------------------------
def _conv_nchw(x, w, b):
    y = lax.conv_general_dilated(
        x, w, window_strides=(1, 1), padding=((1, 1), (1, 1)),
        dimension_numbers=('NCHW', 'OIHW', 'NCHW'))
    return y + b[None, :, None, None]


def ref_forward(x, prev_h, prev_c, tw):
    (w_add, b_add, w_dot, b_dot, w_og, b_og, w_oc, b_oc) = tw
    h = prev_h.shape[1]
    stacked = jnp.concatenate([x, prev_h], axis=1)
    add = _conv_nchw(stacked, w_add, b_add)
    rem = jax.nn.sigmoid(_conv_nchw(stacked, w_dot, b_dot))
    outg = _lrelu(_conv_nchw(stacked, w_og, b_og))
    in_g = jax.nn.sigmoid(add[:, :h])
    cell_g = jnp.tanh(add[:, h:])
    cell = prev_c + in_g * cell_g
    hidden = outg * jnp.tanh(cell)
    cell = rem * cell
    out_h = _lrelu(_conv_nchw(hidden, w_oc, b_oc))
    return out_h, hidden, cell


if __name__ == "__main__":
    input_size, hidden_size = 16, 8
    B, H, W = 2, 16, 16
    Cin = input_size + hidden_size

    key = jax.random.PRNGKey(0)
    ks = jax.random.split(key, 12)

    def nrm(k, shape, s=0.05):
        return jax.random.normal(k, shape, jnp.float32) * s

    # PyTorch-shaped (OIHW) parameters, deterministic init.
    w_add = nrm(ks[0], (2 * hidden_size, Cin, 3, 3))
    b_add = nrm(ks[1], (2 * hidden_size,), 0.01)
    w_dot = nrm(ks[2], (hidden_size, Cin, 3, 3))
    b_dot = nrm(ks[3], (hidden_size,), 0.01)
    w_og  = nrm(ks[4], (hidden_size, Cin, 3, 3))
    b_og  = nrm(ks[5], (hidden_size,), 0.01)
    w_oc  = nrm(ks[6], (input_size, hidden_size, 3, 3))
    b_oc  = nrm(ks[7], (input_size,), 0.01)

    # Inputs (NCHW, as in PyTorch).
    x      = jax.random.normal(ks[8],  (B, input_size, H, W), jnp.float32)
    prev_h = jax.random.normal(ks[9],  (B, hidden_size, H, W), jnp.float32)
    prev_c = jax.random.normal(ks[10], (B, hidden_size, H, W), jnp.float32)

    # Pack params for the fused kernel: gates stacked [Add | Dot | Out],
    # conv weights reshaped to (Cout, 9*Cin) matrices, biases as (Cout, 1).
    wg = _oihw_to_mat(jnp.concatenate([w_add, w_dot, w_og], axis=0))
    bg = jnp.concatenate([b_add, b_dot, b_og])[:, None]
    woc_m = _oihw_to_mat(w_oc)
    boc_m = b_oc[:, None]
    masks = _tap_masks(H, W)
    params = (wg, bg, woc_m, boc_m, masks)

    out_h, hidden, cell = spm32c_pallas(x, prev_h, prev_c, params)
    jax.block_until_ready((out_h, hidden, cell))

    # Verify against the pure-JAX NCHW reference.
    r_out_h, r_hidden, r_cell = ref_forward(
        x, prev_h, prev_c,
        (w_add, b_add, w_dot, b_dot, w_og, b_og, w_oc, b_oc))

    for got, want in ((out_h, r_out_h), (hidden, r_hidden), (cell, r_cell)):
        err = float(jnp.max(jnp.abs(got - want)))
        assert jnp.allclose(got, want, rtol=1e-3, atol=1e-3), err

    print("KERNEL_OK")
</pallas_src>

<mosaic_0001>
module attributes {stable_mosaic.version = 11 : i64} {
  func.func @_spm_kernel(%arg0: i32, %arg1: memref<9x256xf32, #tpu.memory_space<vmem>>, %arg2: memref<1x16x256xf32, #tpu.memory_space<vmem>>, %arg3: memref<1x8x256xf32, #tpu.memory_space<vmem>>, %arg4: memref<1x8x256xf32, #tpu.memory_space<vmem>>, %arg5: memref<32x216xf32, #tpu.memory_space<vmem>>, %arg6: memref<32x1xf32, #tpu.memory_space<vmem>>, %arg7: memref<16x72xf32, #tpu.memory_space<vmem>>, %arg8: memref<16x1xf32, #tpu.memory_space<vmem>>, %arg9: memref<1x16x256xf32, #tpu.memory_space<vmem>>, %arg10: memref<1x8x256xf32, #tpu.memory_space<vmem>>, %arg11: memref<1x8x256xf32, #tpu.memory_space<vmem>>, %arg12: memref<216x256xf32, #tpu.memory_space<vmem>>, %arg13: memref<72x256xf32, #tpu.memory_space<vmem>>) attributes {dimension_semantics = [#tpu.dimension_semantics<parallel>], iteration_bounds = array<i64: 2>, scalar_prefetch = 0 : i64, scratch_operands = 2 : i64, tpu.core_type = #tpu.core_type<tc>, window_params = [{pipeline_mode = #tpu.pipeline_mode<synchronous>, transform_indices = @transform_0, window_bounds = array<i64: 9, 256>}, {transform_indices = @transform_1, window_bounds = array<i64: 1, 16, 256>}, {transform_indices = @transform_2, window_bounds = array<i64: 1, 8, 256>}, {transform_indices = @transform_3, window_bounds = array<i64: 1, 8, 256>}, {pipeline_mode = #tpu.pipeline_mode<synchronous>, transform_indices = @transform_4, window_bounds = array<i64: 32, 216>}, {pipeline_mode = #tpu.pipeline_mode<synchronous>, transform_indices = @transform_5, window_bounds = array<i64: 32, 1>}, {pipeline_mode = #tpu.pipeline_mode<synchronous>, transform_indices = @transform_6, window_bounds = array<i64: 16, 72>}, {pipeline_mode = #tpu.pipeline_mode<synchronous>, transform_indices = @transform_7, window_bounds = array<i64: 16, 1>}, {transform_indices = @transform_8, window_bounds = array<i64: 1, 16, 256>}, {transform_indices = @transform_9, window_bounds = array<i64: 1, 8, 256>}, {transform_indices = @transform_10, window_bounds = array<i64: 1, 8, 256>}]} {
    %c0 = arith.constant 0 : index
    %c0_0 = arith.constant 0 : index
    %0 = vector.load %arg1[%c0, %c0_0] : memref<9x256xf32, #tpu.memory_space<vmem>>, vector<1x256xf32>
    %1 = vector.shape_cast %0 : vector<1x256xf32> to vector<1x256xf32>
    %2 = vector.broadcast %1 : vector<1x256xf32> to vector<24x256xf32>
    %c1 = arith.constant 1 : index
    %c0_1 = arith.constant 0 : index
    %3 = vector.load %arg1[%c1, %c0_1] : memref<9x256xf32, #tpu.memory_space<vmem>>, vector<1x256xf32>
    %4 = vector.shape_cast %3 : vector<1x256xf32> to vector<1x256xf32>
    %5 = vector.broadcast %4 : vector<1x256xf32> to vector<24x256xf32>
    %c2 = arith.constant 2 : index
    %c0_2 = arith.constant 0 : index
    %6 = vector.load %arg1[%c2, %c0_2] : memref<9x256xf32, #tpu.memory_space<vmem>>, vector<1x256xf32>
    %7 = vector.shape_cast %6 : vector<1x256xf32> to vector<1x256xf32>
    %8 = vector.broadcast %7 : vector<1x256xf32> to vector<24x256xf32>
    %c3 = arith.constant 3 : index
    %c0_3 = arith.constant 0 : index
    %9 = vector.load %arg1[%c3, %c0_3] : memref<9x256xf32, #tpu.memory_space<vmem>>, vector<1x256xf32>
    %10 = vector.shape_cast %9 : vector<1x256xf32> to vector<1x256xf32>
    %11 = vector.broadcast %10 : vector<1x256xf32> to vector<24x256xf32>
    %c5 = arith.constant 5 : index
    %c0_4 = arith.constant 0 : index
    %12 = vector.load %arg1[%c5, %c0_4] : memref<9x256xf32, #tpu.memory_space<vmem>>, vector<1x256xf32>
    %13 = vector.shape_cast %12 : vector<1x256xf32> to vector<1x256xf32>
    %14 = vector.broadcast %13 : vector<1x256xf32> to vector<24x256xf32>
    %c6 = arith.constant 6 : index
    %c0_5 = arith.constant 0 : index
    %15 = vector.load %arg1[%c6, %c0_5] : memref<9x256xf32, #tpu.memory_space<vmem>>, vector<1x256xf32>
    %16 = vector.shape_cast %15 : vector<1x256xf32> to vector<1x256xf32>
    %17 = vector.broadcast %16 : vector<1x256xf32> to vector<24x256xf32>
    %c7 = arith.constant 7 : index
    %c0_6 = arith.constant 0 : index
    %18 = vector.load %arg1[%c7, %c0_6] : memref<9x256xf32, #tpu.memory_space<vmem>>, vector<1x256xf32>
    %19 = vector.shape_cast %18 : vector<1x256xf32> to vector<1x256xf32>
    %20 = vector.broadcast %19 : vector<1x256xf32> to vector<24x256xf32>
    %c8 = arith.constant 8 : index
    %c0_7 = arith.constant 0 : index
    %21 = vector.load %arg1[%c8, %c0_7] : memref<9x256xf32, #tpu.memory_space<vmem>>, vector<1x256xf32>
    %22 = vector.shape_cast %21 : vector<1x256xf32> to vector<1x256xf32>
    %23 = vector.broadcast %22 : vector<1x256xf32> to vector<24x256xf32>
    %c0_8 = arith.constant 0 : index
    %c0_9 = arith.constant 0 : index
    %c0_10 = arith.constant 0 : index
    %24 = vector.load %arg2[%c0_8, %c0_9, %c0_10] : memref<1x16x256xf32, #tpu.memory_space<vmem>>, vector<1x16x256xf32>
    %25 = vector.shape_cast %24 : vector<1x16x256xf32> to vector<16x256xf32>
    %c0_11 = arith.constant 0 : index
    %c0_12 = arith.constant 0 : index
    %c0_13 = arith.constant 0 : index
    %26 = vector.load %arg3[%c0_11, %c0_12, %c0_13] : memref<1x8x256xf32, #tpu.memory_space<vmem>>, vector<1x8x256xf32>
    %27 = vector.shape_cast %26 : vector<1x8x256xf32> to vector<8x256xf32>
    %28 = tpu.concatenate %25, %27 in 0 : vector<16x256xf32>, vector<8x256xf32> -> vector<24x256xf32>
    %c17_i32 = arith.constant 17 : i32
    %29 = tpu.dynamic_rotate %28 by %c17_i32 dim 1 : vector<24x256xf32>, i32 -> vector<24x256xf32>
    %30 = arith.mulf %29, %2 : vector<24x256xf32>
    %c0_14 = arith.constant 0 : index
    %c0_15 = arith.constant 0 : index
    %31 = vector.load %arg12[%c0_14, %c0_15] : memref<216x256xf32, #tpu.memory_space<vmem>>, vector<24x256xf32>
    tpu.vector_store %arg12[%c0_14, %c0_15], %30 {strides = array<i32>} : memref<216x256xf32, #tpu.memory_space<vmem>>, vector<24x256xf32>,
    %c16_i32 = arith.constant 16 : i32
    %32 = tpu.dynamic_rotate %28 by %c16_i32 dim 1 : vector<24x256xf32>, i32 -> vector<24x256xf32>
    %33 = arith.mulf %32, %5 : vector<24x256xf32>
    %c24 = arith.constant 24 : index
    %c0_16 = arith.constant 0 : index
    %34 = vector.load %arg12[%c24, %c0_16] : memref<216x256xf32, #tpu.memory_space<vmem>>, vector<24x256xf32>
    tpu.vector_store %arg12[%c24, %c0_16], %33 {strides = array<i32>} : memref<216x256xf32, #tpu.memory_space<vmem>>, vector<24x256xf32>,
    %c15_i32 = arith.constant 15 : i32
    %35 = tpu.dynamic_rotate %28 by %c15_i32 dim 1 : vector<24x256xf32>, i32 -> vector<24x256xf32>
    %36 = arith.mulf %35, %8 : vector<24x256xf32>
    %c48 = arith.constant 48 : index
    %c0_17 = arith.constant 0 : index
    %37 = vector.load %arg12[%c48, %c0_17] : memref<216x256xf32, #tpu.memory_space<vmem>>, vector<24x256xf32>
    tpu.vector_store %arg12[%c48, %c0_17], %36 {strides = array<i32>} : memref<216x256xf32, #tpu.memory_space<vmem>>, vector<24x256xf32>,
    %c1_i32 = arith.constant 1 : i32
    %38 = tpu.dynamic_rotate %28 by %c1_i32 dim 1 : vector<24x256xf32>, i32 -> vector<24x256xf32>
    %39 = arith.mulf %38, %11 : vector<24x256xf32>
    %c72 = arith.constant 72 : index
    %c0_18 = arith.constant 0 : index
    %40 = vector.load %arg12[%c72, %c0_18] : memref<216x256xf32, #tpu.memory_space<vmem>>, vector<24x256xf32>
    tpu.vector_store %arg12[%c72, %c0_18], %39 {strides = array<i32>} : memref<216x256xf32, #tpu.memory_space<vmem>>, vector<24x256xf32>,
    %c96 = arith.constant 96 : index
    %c0_19 = arith.constant 0 : index
    %41 = vector.load %arg12[%c96, %c0_19] : memref<216x256xf32, #tpu.memory_space<vmem>>, vector<24x256xf32>
    tpu.vector_store %arg12[%c96, %c0_19], %28 {strides = array<i32>} : memref<216x256xf32, #tpu.memory_space<vmem>>, vector<24x256xf32>,
    %c255_i32 = arith.constant 255 : i32
    %42 = tpu.dynamic_rotate %28 by %c255_i32 dim 1 : vector<24x256xf32>, i32 -> vector<24x256xf32>
    %43 = arith.mulf %42, %14 : vector<24x256xf32>
    %c120 = arith.constant 120 : index
    %c0_20 = arith.constant 0 : index
    %44 = vector.load %arg12[%c120, %c0_20] : memref<216x256xf32, #tpu.memory_space<vmem>>, vector<24x256xf32>
    tpu.vector_store %arg12[%c120, %c0_20], %43 {strides = array<i32>} : memref<216x256xf32, #tpu.memory_space<vmem>>, vector<24x256xf32>,
    %c241_i32 = arith.constant 241 : i32
    %45 = tpu.dynamic_rotate %28 by %c241_i32 dim 1 : vector<24x256xf32>, i32 -> vector<24x256xf32>
    %46 = arith.mulf %45, %17 : vector<24x256xf32>
    %c144 = arith.constant 144 : index
    %c0_21 = arith.constant 0 : index
    %47 = vector.load %arg12[%c144, %c0_21] : memref<216x256xf32, #tpu.memory_space<vmem>>, vector<24x256xf32>
    tpu.vector_store %arg12[%c144, %c0_21], %46 {strides = array<i32>} : memref<216x256xf32, #tpu.memory_space<vmem>>, vector<24x256xf32>,
    %c240_i32 = arith.constant 240 : i32
    %48 = tpu.dynamic_rotate %28 by %c240_i32 dim 1 : vector<24x256xf32>, i32 -> vector<24x256xf32>
    %49 = arith.mulf %48, %20 : vector<24x256xf32>
    %c168 = arith.constant 168 : index
    %c0_22 = arith.constant 0 : index
    %50 = vector.load %arg12[%c168, %c0_22] : memref<216x256xf32, #tpu.memory_space<vmem>>, vector<24x256xf32>
    tpu.vector_store %arg12[%c168, %c0_22], %49 {strides = array<i32>} : memref<216x256xf32, #tpu.memory_space<vmem>>, vector<24x256xf32>,
    %c239_i32 = arith.constant 239 : i32
    %51 = tpu.dynamic_rotate %28 by %c239_i32 dim 1 : vector<24x256xf32>, i32 -> vector<24x256xf32>
    %52 = arith.mulf %51, %23 : vector<24x256xf32>
    %c192 = arith.constant 192 : index
    %c0_23 = arith.constant 0 : index
    %53 = vector.load %arg12[%c192, %c0_23] : memref<216x256xf32, #tpu.memory_space<vmem>>, vector<24x256xf32>
    tpu.vector_store %arg12[%c192, %c0_23], %52 {strides = array<i32>} : memref<216x256xf32, #tpu.memory_space<vmem>>, vector<24x256xf32>,
    %c0_24 = arith.constant 0 : index
    %c0_25 = arith.constant 0 : index
    %54 = vector.load %arg5[%c0_24, %c0_25] : memref<32x216xf32, #tpu.memory_space<vmem>>, vector<32x216xf32>
    %c0_26 = arith.constant 0 : index
    %c0_27 = arith.constant 0 : index
    %55 = vector.load %arg12[%c0_26, %c0_27] : memref<216x256xf32, #tpu.memory_space<vmem>>, vector<216x256xf32>
    %cst = arith.constant dense<0.000000e+00> : vector<32x256xf32>
    %56 = tpu.matmul %54, %55, %cst {dimension_numbers = #tpu.dot_dimension_numbers<[1], [0], [0], [1], [0, 0, 1, 1], [], []>} : vector<32x216xf32>, vector<216x256xf32>, vector<32x256xf32> -> vector<32x256xf32>
    %c0_28 = arith.constant 0 : index
    %c0_29 = arith.constant 0 : index
    %57 = vector.load %arg6[%c0_28, %c0_29] : memref<32x1xf32, #tpu.memory_space<vmem>>, vector<32x1xf32>
    %58 = vector.broadcast %57 : vector<32x1xf32> to vector<32x256xf32>
    %59 = arith.addf %56, %58 : vector<32x256xf32>
    %60 = vector.extract_strided_slice %59 {offsets = [0, 0], sizes = [8, 256], strides = [1, 1]} : vector<32x256xf32> to vector<8x256xf32>
    %61 = arith.negf %60 : vector<8x256xf32>
    %62 = math.exp %61 : vector<8x256xf32>
    %cst_30 = arith.constant 1.000000e+00 : f32
    %63 = vector.broadcast %cst_30 : f32 to vector<8x256xf32>
    %64 = arith.addf %63, %62 : vector<8x256xf32>
    %65 = arith.divf %63, %64 : vector<8x256xf32>
    %66 = vector.extract_strided_slice %59 {offsets = [8, 0], sizes = [8, 256], strides = [1, 1]} : vector<32x256xf32> to vector<8x256xf32>
    %67 = math.tanh %66 : vector<8x256xf32>
    %68 = vector.extract_strided_slice %59 {offsets = [16, 0], sizes = [8, 256], strides = [1, 1]} : vector<32x256xf32> to vector<8x256xf32>
    %69 = arith.negf %68 : vector<8x256xf32>
    %70 = math.exp %69 : vector<8x256xf32>
    %cst_31 = arith.constant 1.000000e+00 : f32
    %71 = vector.broadcast %cst_31 : f32 to vector<8x256xf32>
    %72 = arith.addf %71, %70 : vector<8x256xf32>
    %73 = arith.divf %71, %72 : vector<8x256xf32>
    %74 = vector.extract_strided_slice %59 {offsets = [24, 0], sizes = [8, 256], strides = [1, 1]} : vector<32x256xf32> to vector<8x256xf32>
    %cst_32 = arith.constant 0.000000e+00 : f32
    %75 = vector.broadcast %cst_32 : f32 to vector<8x256xf32>
    %76 = arith.cmpf oge, %74, %75 : vector<8x256xf32>
    %cst_33 = arith.constant 1.000000e-01 : f32
    %77 = vector.broadcast %cst_33 : f32 to vector<8x256xf32>
    %78 = arith.mulf %77, %74 : vector<8x256xf32>
    %79 = arith.select %76, %74, %78 : vector<8x256xi1>, vector<8x256xf32>
    %c0_34 = arith.constant 0 : index
    %c0_35 = arith.constant 0 : index
    %c0_36 = arith.constant 0 : index
    %80 = vector.load %arg4[%c0_34, %c0_35, %c0_36] : memref<1x8x256xf32, #tpu.memory_space<vmem>>, vector<1x8x256xf32>
    %81 = vector.shape_cast %80 : vector<1x8x256xf32> to vector<8x256xf32>
    %82 = arith.mulf %65, %67 : vector<8x256xf32>
    %83 = arith.addf %81, %82 : vector<8x256xf32>
    %84 = math.tanh %83 : vector<8x256xf32>
    %85 = arith.mulf %79, %84 : vector<8x256xf32>
    %86 = arith.mulf %73, %83 : vector<8x256xf32>
    %c0_37 = arith.constant 0 : index
    %c0_38 = arith.constant 0 : index
    %c0_39 = arith.constant 0 : index
    %87 = vector.load %arg10[%c0_37, %c0_38, %c0_39] : memref<1x8x256xf32, #tpu.memory_space<vmem>>, vector<1x8x256xf32>
    %88 = vector.shape_cast %87 : vector<1x8x256xf32> to vector<8x256xf32>
    %89 = vector.shape_cast %85 : vector<8x256xf32> to vector<1x8x256xf32>
    tpu.vector_store %arg10[%c0_37, %c0_38, %c0_39], %89 {strides = array<i32>} : memref<1x8x256xf32, #tpu.memory_space<vmem>>, vector<1x8x256xf32>,
    %c0_40 = arith.constant 0 : index
    %c0_41 = arith.constant 0 : index
    %c0_42 = arith.constant 0 : index
    %90 = vector.load %arg11[%c0_40, %c0_41, %c0_42] : memref<1x8x256xf32, #tpu.memory_space<vmem>>, vector<1x8x256xf32>
    %91 = vector.shape_cast %90 : vector<1x8x256xf32> to vector<8x256xf32>
    %92 = vector.shape_cast %86 : vector<8x256xf32> to vector<1x8x256xf32>
    tpu.vector_store %arg11[%c0_40, %c0_41, %c0_42], %92 {strides = array<i32>} : memref<1x8x256xf32, #tpu.memory_space<vmem>>, vector<1x8x256xf32>,
    %c17_i32_43 = arith.constant 17 : i32
    %93 = tpu.dynamic_rotate %85 by %c17_i32_43 dim 1 : vector<8x256xf32>, i32 -> vector<8x256xf32>
    %94 = vector.extract_strided_slice %2 {offsets = [0, 0], sizes = [8, 256], strides = [1, 1]} : vector<24x256xf32> to vector<8x256xf32>
    %95 = arith.mulf %93, %94 : vector<8x256xf32>
    %c0_44 = arith.constant 0 : index
    %c0_45 = arith.constant 0 : index
    %96 = vector.load %arg13[%c0_44, %c0_45] : memref<72x256xf32, #tpu.memory_space<vmem>>, vector<8x256xf32>
    tpu.vector_store %arg13[%c0_44, %c0_45], %95 {strides = array<i32>} : memref<72x256xf32, #tpu.memory_space<vmem>>, vector<8x256xf32>,
    %c16_i32_46 = arith.constant 16 : i32
    %97 = tpu.dynamic_rotate %85 by %c16_i32_46 dim 1 : vector<8x256xf32>, i32 -> vector<8x256xf32>
    %98 = vector.extract_strided_slice %5 {offsets = [0, 0], sizes = [8, 256], strides = [1, 1]} : vector<24x256xf32> to vector<8x256xf32>
    %99 = arith.mulf %97, %98 : vector<8x256xf32>
    %c8_47 = arith.constant 8 : index
    %c0_48 = arith.constant 0 : index
    %100 = vector.load %arg13[%c8_47, %c0_48] : memref<72x256xf32, #tpu.memory_space<vmem>>, vector<8x256xf32>
    tpu.vector_store %arg13[%c8_47, %c0_48], %99 {strides = array<i32>} : memref<72x256xf32, #tpu.memory_space<vmem>>, vector<8x256xf32>,
    %c15_i32_49 = arith.constant 15 : i32
    %101 = tpu.dynamic_rotate %85 by %c15_i32_49 dim 1 : vector<8x256xf32>, i32 -> vector<8x256xf32>
    %102 = vector.extract_strided_slice %8 {offsets = [0, 0], sizes = [8, 256], strides = [1, 1]} : vector<24x256xf32> to vector<8x256xf32>
    %103 = arith.mulf %101, %102 : vector<8x256xf32>
    %c16 = arith.constant 16 : index
    %c0_50 = arith.constant 0 : index
    %104 = vector.load %arg13[%c16, %c0_50] : memref<72x256xf32, #tpu.memory_space<vmem>>, vector<8x256xf32>
    tpu.vector_store %arg13[%c16, %c0_50], %103 {strides = array<i32>} : memref<72x256xf32, #tpu.memory_space<vmem>>, vector<8x256xf32>,
    %c1_i32_51 = arith.constant 1 : i32
    %105 = tpu.dynamic_rotate %85 by %c1_i32_51 dim 1 : vector<8x256xf32>, i32 -> vector<8x256xf32>
    %106 = vector.extract_strided_slice %11 {offsets = [0, 0], sizes = [8, 256], strides = [1, 1]} : vector<24x256xf32> to vector<8x256xf32>
    %107 = arith.mulf %105, %106 : vector<8x256xf32>
    %c24_52 = arith.constant 24 : index
    %c0_53 = arith.constant 0 : index
    %108 = vector.load %arg13[%c24_52, %c0_53] : memref<72x256xf32, #tpu.memory_space<vmem>>, vector<8x256xf32>
    tpu.vector_store %arg13[%c24_52, %c0_53], %107 {strides = array<i32>} : memref<72x256xf32, #tpu.memory_space<vmem>>, vector<8x256xf32>,
    %c32 = arith.constant 32 : index
    %c0_54 = arith.constant 0 : index
    %109 = vector.load %arg13[%c32, %c0_54] : memref<72x256xf32, #tpu.memory_space<vmem>>, vector<8x256xf32>
    tpu.vector_store %arg13[%c32, %c0_54], %85 {strides = array<i32>} : memref<72x256xf32, #tpu.memory_space<vmem>>, vector<8x256xf32>,
    %c255_i32_55 = arith.constant 255 : i32
    %110 = tpu.dynamic_rotate %85 by %c255_i32_55 dim 1 : vector<8x256xf32>, i32 -> vector<8x256xf32>
    %111 = vector.extract_strided_slice %14 {offsets = [0, 0], sizes = [8, 256], strides = [1, 1]} : vector<24x256xf32> to vector<8x256xf32>
    %112 = arith.mulf %110, %111 : vector<8x256xf32>
    %c40 = arith.constant 40 : index
    %c0_56 = arith.constant 0 : index
    %113 = vector.load %arg13[%c40, %c0_56] : memref<72x256xf32, #tpu.memory_space<vmem>>, vector<8x256xf32>
    tpu.vector_store %arg13[%c40, %c0_56], %112 {strides = array<i32>} : memref<72x256xf32, #tpu.memory_space<vmem>>, vector<8x256xf32>,
    %c241_i32_57 = arith.constant 241 : i32
    %114 = tpu.dynamic_rotate %85 by %c241_i32_57 dim 1 : vector<8x256xf32>, i32 -> vector<8x256xf32>
    %115 = vector.extract_strided_slice %17 {offsets = [0, 0], sizes = [8, 256], strides = [1, 1]} : vector<24x256xf32> to vector<8x256xf32>
    %116 = arith.mulf %114, %115 : vector<8x256xf32>
    %c48_58 = arith.constant 48 : index
    %c0_59 = arith.constant 0 : index
    %117 = vector.load %arg13[%c48_58, %c0_59] : memref<72x256xf32, #tpu.memory_space<vmem>>, vector<8x256xf32>
    tpu.vector_store %arg13[%c48_58, %c0_59], %116 {strides = array<i32>} : memref<72x256xf32, #tpu.memory_space<vmem>>, vector<8x256xf32>,
    %c240_i32_60 = arith.constant 240 : i32
    %118 = tpu.dynamic_rotate %85 by %c240_i32_60 dim 1 : vector<8x256xf32>, i32 -> vector<8x256xf32>
    %119 = vector.extract_strided_slice %20 {offsets = [0, 0], sizes = [8, 256], strides = [1, 1]} : vector<24x256xf32> to vector<8x256xf32>
    %120 = arith.mulf %118, %119 : vector<8x256xf32>
    %c56 = arith.constant 56 : index
    %c0_61 = arith.constant 0 : index
    %121 = vector.load %arg13[%c56, %c0_61] : memref<72x256xf32, #tpu.memory_space<vmem>>, vector<8x256xf32>
    tpu.vector_store %arg13[%c56, %c0_61], %120 {strides = array<i32>} : memref<72x256xf32, #tpu.memory_space<vmem>>, vector<8x256xf32>,
    %c239_i32_62 = arith.constant 239 : i32
    %122 = tpu.dynamic_rotate %85 by %c239_i32_62 dim 1 : vector<8x256xf32>, i32 -> vector<8x256xf32>
    %123 = vector.extract_strided_slice %23 {offsets = [0, 0], sizes = [8, 256], strides = [1, 1]} : vector<24x256xf32> to vector<8x256xf32>
    %124 = arith.mulf %122, %123 : vector<8x256xf32>
    %c64 = arith.constant 64 : index
    %c0_63 = arith.constant 0 : index
    %125 = vector.load %arg13[%c64, %c0_63] : memref<72x256xf32, #tpu.memory_space<vmem>>, vector<8x256xf32>
    tpu.vector_store %arg13[%c64, %c0_63], %124 {strides = array<i32>} : memref<72x256xf32, #tpu.memory_space<vmem>>, vector<8x256xf32>,
    %c0_64 = arith.constant 0 : index
    %c0_65 = arith.constant 0 : index
    %126 = vector.load %arg7[%c0_64, %c0_65] : memref<16x72xf32, #tpu.memory_space<vmem>>, vector<16x72xf32>
    %c0_66 = arith.constant 0 : index
    %c0_67 = arith.constant 0 : index
    %127 = vector.load %arg13[%c0_66, %c0_67] : memref<72x256xf32, #tpu.memory_space<vmem>>, vector<72x256xf32>
    %cst_68 = arith.constant dense<0.000000e+00> : vector<16x256xf32>
    %128 = tpu.matmul %126, %127, %cst_68 {dimension_numbers = #tpu.dot_dimension_numbers<[1], [0], [0], [1], [0, 0, 1, 1], [], []>} : vector<16x72xf32>, vector<72x256xf32>, vector<16x256xf32> -> vector<16x256xf32>
    %c0_69 = arith.constant 0 : index
    %c0_70 = arith.constant 0 : index
    %129 = vector.load %arg8[%c0_69, %c0_70] : memref<16x1xf32, #tpu.memory_space<vmem>>, vector<16x1xf32>
    %130 = vector.broadcast %129 : vector<16x1xf32> to vector<16x256xf32>
    %131 = arith.addf %128, %130 : vector<16x256xf32>
    %cst_71 = arith.constant 0.000000e+00 : f32
    %132 = vector.broadcast %cst_71 : f32 to vector<16x256xf32>
    %133 = arith.cmpf oge, %131, %132 : vector<16x256xf32>
    %cst_72 = arith.constant 1.000000e-01 : f32
    %134 = vector.broadcast %cst_72 : f32 to vector<16x256xf32>
    %135 = arith.mulf %134, %131 : vector<16x256xf32>
    %136 = arith.select %133, %131, %135 : vector<16x256xi1>, vector<16x256xf32>
    %c0_73 = arith.constant 0 : index
    %c0_74 = arith.constant 0 : index
    %c0_75 = arith.constant 0 : index
    %137 = vector.load %arg9[%c0_73, %c0_74, %c0_75] : memref<1x16x256xf32, #tpu.memory_space<vmem>>, vector<1x16x256xf32>
    %138 = vector.shape_cast %137 : vector<1x16x256xf32> to vector<16x256xf32>
    %139 = vector.shape_cast %136 : vector<16x256xf32> to vector<1x16x256xf32>
    tpu.vector_store %arg9[%c0_73, %c0_74, %c0_75], %139 {strides = array<i32>} : memref<1x16x256xf32, #tpu.memory_space<vmem>>, vector<1x16x256xf32>,
    return
  }
  func.func @transform_0(%arg0: i32) -> (i32, i32) {
    %c0_i32 = arith.constant 0 : i32
    %c0_i32_0 = arith.constant 0 : i32
    %c0_i32_1 = arith.constant 0 : i32
    return %c0_i32, %c0_i32_0 : i32, i32
  }
  func.func @transform_1(%arg0: i32) -> (i32, i32, i32) {
    %c0_i32 = arith.constant 0 : i32
    %c0_i32_0 = arith.constant 0 : i32
    %c0_i32_1 = arith.constant 0 : i32
    return %arg0, %c0_i32, %c0_i32_0 : i32, i32, i32
  }
  func.func @transform_2(%arg0: i32) -> (i32, i32, i32) {
    %c0_i32 = arith.constant 0 : i32
    %c0_i32_0 = arith.constant 0 : i32
    %c0_i32_1 = arith.constant 0 : i32
    return %arg0, %c0_i32, %c0_i32_0 : i32, i32, i32
  }
  func.func @transform_3(%arg0: i32) -> (i32, i32, i32) {
    %c0_i32 = arith.constant 0 : i32
    %c0_i32_0 = arith.constant 0 : i32
    %c0_i32_1 = arith.constant 0 : i32
    return %arg0, %c0_i32, %c0_i32_0 : i32, i32, i32
  }
  func.func @transform_4(%arg0: i32) -> (i32, i32) {
    %c0_i32 = arith.constant 0 : i32
    %c0_i32_0 = arith.constant 0 : i32
    %c0_i32_1 = arith.constant 0 : i32
    return %c0_i32, %c0_i32_0 : i32, i32
  }
  func.func @transform_5(%arg0: i32) -> (i32, i32) {
    %c0_i32 = arith.constant 0 : i32
    %c0_i32_0 = arith.constant 0 : i32
    %c0_i32_1 = arith.constant 0 : i32
    return %c0_i32, %c0_i32_0 : i32, i32
  }
  func.func @transform_6(%arg0: i32) -> (i32, i32) {
    %c0_i32 = arith.constant 0 : i32
    %c0_i32_0 = arith.constant 0 : i32
    %c0_i32_1 = arith.constant 0 : i32
    return %c0_i32, %c0_i32_0 : i32, i32
  }
  func.func @transform_7(%arg0: i32) -> (i32, i32) {
    %c0_i32 = arith.constant 0 : i32
    %c0_i32_0 = arith.constant 0 : i32
    %c0_i32_1 = arith.constant 0 : i32
    return %c0_i32, %c0_i32_0 : i32, i32
  }
  func.func @transform_8(%arg0: i32) -> (i32, i32, i32) {
    %c0_i32 = arith.constant 0 : i32
    %c0_i32_0 = arith.constant 0 : i32
    %c0_i32_1 = arith.constant 0 : i32
    return %arg0, %c0_i32, %c0_i32_0 : i32, i32, i32
  }
  func.func @transform_9(%arg0: i32) -> (i32, i32, i32) {
    %c0_i32 = arith.constant 0 : i32
    %c0_i32_0 = arith.constant 0 : i32
    %c0_i32_1 = arith.constant 0 : i32
    return %arg0, %c0_i32, %c0_i32_0 : i32, i32, i32
  }
  func.func @transform_10(%arg0: i32) -> (i32, i32, i32) {
    %c0_i32 = arith.constant 0 : i32
    %c0_i32_0 = arith.constant 0 : i32
    %c0_i32_1 = arith.constant 0 : i32
    return %arg0, %c0_i32, %c0_i32_0 : i32, i32, i32
  }
}

</mosaic_0001>

<llo_original>
// kernel: _spm32c_core.1
$region0: #{_spm32c_core.1}
  #allocation0 [shape = 'u32[]', space=smem, size = 0x4, offset = 0x4, fixed_abs, tag = 'smem constant byte address 0x4 - core index']
  #allocation1 [shape = 'u32[72,128]{1,0:T(1,128)}', space=vmem, size = 0x9000, scoped, tag = 'internal scratch']
  #allocation2 [shape = 'f32[216,256]{1,0:T(8,128)}', space=vmem, size = 0x36000, scoped, tag = 'scratch operand']
  #allocation3 [shape = 'f32[72,256]{1,0:T(8,128)}', space=vmem, size = 0x12000, scoped, tag = 'scratch operand']
  %s0 = inlined_call_operand.vmem [shape: f32[9,256], index: 0, kind: input, shape index: {}]
  %s1 = inlined_call_operand.vmem [shape: f32[2,16,256], index: 1, kind: input, shape index: {}]
  %s2 = inlined_call_operand.vmem [shape: f32[2,8,256], index: 2, kind: input, shape index: {}]
  %s3 = inlined_call_operand.vmem [shape: f32[2,8,256], index: 3, kind: input, shape index: {}]
  %s4 = inlined_call_operand.vmem [shape: f32[32,216], index: 4, kind: input, shape index: {}]
  %s5 = inlined_call_operand.vmem [shape: f32[32,1], index: 5, kind: input, shape index: {}]
  %s6 = inlined_call_operand.vmem [shape: f32[16,72], index: 6, kind: input, shape index: {}]
  %s7 = inlined_call_operand.vmem [shape: f32[16,1], index: 7, kind: input, shape index: {}]
  %s8 = inlined_call_operand.vmem [shape: f32[2,16,256], index: 8, kind: output, shape index: {0}]
  %s9 = inlined_call_operand.vmem [shape: f32[2,8,256], index: 9, kind: output, shape index: {1}]
  %s10 = inlined_call_operand.vmem [shape: f32[2,8,256], index: 10, kind: output, shape index: {2}]
  %11 = xla_tuple %s8, %s9, %s10
  %s12 = sld [smem:[#allocation0]]
  $region81: #{_spm32c_core.1} parent=0
    _
  %s14 = ssub.s32 1, %s12
  %s15 = scalar_select 0, %s14, %s12
  loop: start=0, step=1, limit=4
  $region2: #{_spm32c_core.1} parent=0 // loop_pre_header
    _
  $region3: #{_spm32c_core.1} parent=0 // loop_header
    %s17 = sphi 0, %s21
    %p18 = scmp.ge.s32.totalorder %s17, 4
    %s25 = sphi 0, %s25
    %s27 = sphi 0, %s25
    %s28 = sphi 0, %s27
    %s42 = sphi 0, %s28
    %s48 = sphi 0, %s50
    %s51 = sphi 0, %s48
    %s52 = sphi 0, %s51
    %s68 = sphi 0, %s52
    %s74 = sphi 0, %s76
    %s77 = sphi 0, %s74
    %s78 = sphi 0, %s77
    %s94 = sphi 0, %s78
    %s100 = sphi 0, %s102
    %s103 = sphi 0, %s100
    %s104 = sphi 0, %s103
    %s120 = sphi 0, %s104
    %s124 = sphi 0, %s124
    %s126 = sphi 0, %s124
    %s127 = sphi 0, %s126
    %s141 = sphi 0, %s127
    %s145 = sphi 0, %s145
    %s147 = sphi 0, %s145
    %s148 = sphi 0, %s147
    %s162 = sphi 0, %s148
    %s166 = sphi 0, %s166
    %s168 = sphi 0, %s166
    %s169 = sphi 0, %s168
    %s183 = sphi 0, %s169
    %s187 = sphi 0, %s187
    %s189 = sphi 0, %s187
    %s190 = sphi 0, %s189
    %s204 = sphi 0, %s190
    %s210 = sphi 0, %s212
    %s213 = sphi 0, %s210
    %s214 = sphi 0, %s213
    %s230 = sphi 0, %s214
    %s236 = sphi 0, %s238
    %s239 = sphi 0, %s236
    %s240 = sphi 0, %s239
    %s256 = sphi 0, %s240
    %s262 = sphi 0, %s264
    %s265 = sphi 0, %s262
    %s266 = sphi 0, %s265
    %s282 = sphi 0, %s266
  $region4: #{_spm32c_core.1} parent=0 // loop_header_branch
    %20 = sbr.rel (%p18) target = $region8
  $region5: #{_spm32c_core.1} parent=0 // loop_body
    %s22 = ssub.s32 %s17, 1
    %s23 = ssub.s32 %s17, 2
    %s24 = sadd.s32 %s17, 1
    %s26 = sadd.s32 %s25, 1
    %p29 = scmp.eq.s32.totalorder %s17, 1
    %p30 = scmp.ne.s32.totalorder %s25, %s27
    %p31 = scmp.eq.s32.totalorder %s17, 0
    %p32 = por %p30, %p31
    %p33 = scmp.ne.s32.totalorder %s25, %s27
    %p34 = scmp.eq.s32.totalorder %s22, 1
    %p35 = por %p33, %p34
    %p36 = scmp.ne.s32.totalorder %s27, %s28
    %p37 = scmp.eq.s32.totalorder %s22, 0
    %p38 = por %p36, %p37
    %p39 = scmp.ne.s32.totalorder %s27, %s28
    %p40 = scmp.eq.s32.totalorder %s23, 1
    %p41 = por %p39, %p40
    %p43 = scmp.ne.s32.totalorder %s28, %s42
    %p44 = scmp.eq.s32.totalorder %s23, 0
    %p45 = por %p43, %p44
    %s46 = ssub.s32 %s17, %s24
    %p47 = scmp.eq.s32.totalorder %s46, 0
    %s49 = sadd.s32 %s48, 1
    %s50 = scalar_select %p47, %s48, %s49
    %p53 = pneg %p47
    %p54 = scmp.eq.s32.totalorder %s17, 1
    %p55 = por %p53, %p54
    %p56 = scmp.ne.s32.totalorder %s48, %s51
    %p57 = scmp.eq.s32.totalorder %s17, 0
    %p58 = por %p56, %p57
    %p59 = scmp.ne.s32.totalorder %s48, %s51
    %p60 = scmp.eq.s32.totalorder %s22, 1
    %p61 = por %p59, %p60
    %p62 = scmp.ne.s32.totalorder %s51, %s52
    %p63 = scmp.eq.s32.totalorder %s22, 0
    %p64 = por %p62, %p63
    %p65 = scmp.ne.s32.totalorder %s51, %s52
    %p66 = scmp.eq.s32.totalorder %s23, 1
    %p67 = por %p65, %p66
    %p69 = scmp.ne.s32.totalorder %s52, %s68
    %p70 = scmp.eq.s32.totalorder %s23, 0
    %p71 = por %p69, %p70
    %s72 = ssub.s32 %s17, %s24
    %p73 = scmp.eq.s32.totalorder %s72, 0
    %s75 = sadd.s32 %s74, 1
    %s76 = scalar_select %p73, %s74, %s75
    %p79 = pneg %p73
    %p80 = scmp.eq.s32.totalorder %s17, 1
    %p81 = por %p79, %p80
    %p82 = scmp.ne.s32.totalorder %s74, %s77
    %p83 = scmp.eq.s32.totalorder %s17, 0
    %p84 = por %p82, %p83
    %p85 = scmp.ne.s32.totalorder %s74, %s77
    %p86 = scmp.eq.s32.totalorder %s22, 1
    %p87 = por %p85, %p86
    %p88 = scmp.ne.s32.totalorder %s77, %s78
    %p89 = scmp.eq.s32.totalorder %s22, 0
    %p90 = por %p88, %p89
    %p91 = scmp.ne.s32.totalorder %s77, %s78
    %p92 = scmp.eq.s32.totalorder %s23, 1
    %p93 = por %p91, %p92
    %p95 = scmp.ne.s32.totalorder %s78, %s94
    %p96 = scmp.eq.s32.totalorder %s23, 0
    %p97 = por %p95, %p96
    %s98 = ssub.s32 %s17, %s24
    %p99 = scmp.eq.s32.totalorder %s98, 0
    %s101 = sadd.s32 %s100, 1
    %s102 = scalar_select %p99, %s100, %s101
    %p105 = pneg %p99
    %p106 = scmp.eq.s32.totalorder %s17, 1
    %p107 = por %p105, %p106
    %p108 = scmp.ne.s32.totalorder %s100, %s103
    %p109 = scmp.eq.s32.totalorder %s17, 0
    %p110 = por %p108, %p109
    %p111 = scmp.ne.s32.totalorder %s100, %s103
    %p112 = scmp.eq.s32.totalorder %s22, 1
    %p113 = por %p111, %p112
    %p114 = scmp.ne.s32.totalorder %s103, %s104
    %p115 = scmp.eq.s32.totalorder %s22, 0
    %p116 = por %p114, %p115
    %p117 = scmp.ne.s32.totalorder %s103, %s104
    %p118 = scmp.eq.s32.totalorder %s23, 1
    %p119 = por %p117, %p118
    %p121 = scmp.ne.s32.totalorder %s104, %s120
    %p122 = scmp.eq.s32.totalorder %s23, 0
    %p123 = por %p121, %p122
    %s125 = sadd.s32 %s124, 1
    %p128 = scmp.eq.s32.totalorder %s17, 1
    %p129 = scmp.ne.s32.totalorder %s124, %s126
    %p130 = scmp.eq.s32.totalorder %s17, 0
    %p131 = por %p129, %p130
    %p132 = scmp.ne.s32.totalorder %s124, %s126
    %p133 = scmp.eq.s32.totalorder %s22, 1
    %p134 = por %p132, %p133
    %p135 = scmp.ne.s32.totalorder %s126, %s127
    %p136 = scmp.eq.s32.totalorder %s22, 0
    %p137 = por %p135, %p136
    %p138 = scmp.ne.s32.totalorder %s126, %s127
    %p139 = scmp.eq.s32.totalorder %s23, 1
    %p140 = por %p138, %p139
    %p142 = scmp.ne.s32.totalorder %s127, %s141
    %p143 = scmp.eq.s32.totalorder %s23, 0
    %p144 = por %p142, %p143
    %s146 = sadd.s32 %s145, 1
    %p149 = scmp.eq.s32.totalorder %s17, 1
    %p150 = scmp.ne.s32.totalorder %s145, %s147
    %p151 = scmp.eq.s32.totalorder %s17, 0
    %p152 = por %p150, %p151
    %p153 = scmp.ne.s32.totalorder %s145, %s147
    %p154 = scmp.eq.s32.totalorder %s22, 1
    %p155 = por %p153, %p154
    %p156 = scmp.ne.s32.totalorder %s147, %s148
    %p157 = scmp.eq.s32.totalorder %s22, 0
    %p158 = por %p156, %p157
    %p159 = scmp.ne.s32.totalorder %s147, %s148
    %p160 = scmp.eq.s32.totalorder %s23, 1
    %p161 = por %p159, %p160
    %p163 = scmp.ne.s32.totalorder %s148, %s162
    %p164 = scmp.eq.s32.totalorder %s23, 0
    %p165 = por %p163, %p164
    %s167 = sadd.s32 %s166, 1
    %p170 = scmp.eq.s32.totalorder %s17, 1
    %p171 = scmp.ne.s32.totalorder %s166, %s168
    %p172 = scmp.eq.s32.totalorder %s17, 0
    %p173 = por %p171, %p172
    %p174 = scmp.ne.s32.totalorder %s166, %s168
    %p175 = scmp.eq.s32.totalorder %s22, 1
    %p176 = por %p174, %p175
    %p177 = scmp.ne.s32.totalorder %s168, %s169
    %p178 = scmp.eq.s32.totalorder %s22, 0
    %p179 = por %p177, %p178
    %p180 = scmp.ne.s32.totalorder %s168, %s169
    %p181 = scmp.eq.s32.totalorder %s23, 1
    %p182 = por %p180, %p181
    %p184 = scmp.ne.s32.totalorder %s169, %s183
    %p185 = scmp.eq.s32.totalorder %s23, 0
    %p186 = por %p184, %p185
    %s188 = sadd.s32 %s187, 1
    %p191 = scmp.eq.s32.totalorder %s17, 1
    %p192 = scmp.ne.s32.totalorder %s187, %s189
    %p193 = scmp.eq.s32.totalorder %s17, 0
    %p194 = por %p192, %p193
    %p195 = scmp.ne.s32.totalorder %s187, %s189
    %p196 = scmp.eq.s32.totalorder %s22, 1
    %p197 = por %p195, %p196
    %p198 = scmp.ne.s32.totalorder %s189, %s190
    %p199 = scmp.eq.s32.totalorder %s22, 0
    %p200 = por %p198, %p199
    %p201 = scmp.ne.s32.totalorder %s189, %s190
    %p202 = scmp.eq.s32.totalorder %s23, 1
    %p203 = por %p201, %p202
    %p205 = scmp.ne.s32.totalorder %s190, %s204
    %p206 = scmp.eq.s32.totalorder %s23, 0
    %p207 = por %p205, %p206
    %s208 = ssub.s32 %s17, %s24
    %p209 = scmp.eq.s32.totalorder %s208, 0
    %s211 = sadd.s32 %s210, 1
    %s212 = scalar_select %p209, %s210, %s211
    %p215 = pneg %p209
    %p216 = scmp.eq.s32.totalorder %s17, 1
    %p217 = por %p215, %p216
    %p218 = scmp.ne.s32.totalorder %s210, %s213
    %p219 = scmp.eq.s32.totalorder %s17, 0
    %p220 = por %p218, %p219
    %p221 = scmp.ne.s32.totalorder %s210, %s213
    %p222 = scmp.eq.s32.totalorder %s22, 1
    %p223 = por %p221, %p222
    %p224 = scmp.ne.s32.totalorder %s213, %s214
    %p225 = scmp.eq.s32.totalorder %s22, 0
    %p226 = por %p224, %p225
    %p227 = scmp.ne.s32.totalorder %s213, %s214
    %p228 = scmp.eq.s32.totalorder %s23, 1
    %p229 = por %p227, %p228
    %p231 = scmp.ne.s32.totalorder %s214, %s230
    %p232 = scmp.eq.s32.totalorder %s23, 0
    %p233 = por %p231, %p232
    %s234 = ssub.s32 %s17, %s24
    %p235 = scmp.eq.s32.totalorder %s234, 0
    %s237 = sadd.s32 %s236, 1
    %s238 = scalar_select %p235, %s236, %s237
    %p241 = pneg %p235
    %p242 = scmp.eq.s32.totalorder %s17, 1
    %p243 = por %p241, %p242
    %p244 = scmp.ne.s32.totalorder %s236, %s239
    %p245 = scmp.eq.s32.totalorder %s17, 0
    %p246 = por %p244, %p245
    %p247 = scmp.ne.s32.totalorder %s236, %s239
    %p248 = scmp.eq.s32.totalorder %s22, 1
    %p249 = por %p247, %p248
    %p250 = scmp.ne.s32.totalorder %s239, %s240
    %p251 = scmp.eq.s32.totalorder %s22, 0
    %p252 = por %p250, %p251
    %p253 = scmp.ne.s32.totalorder %s239, %s240
    %p254 = scmp.eq.s32.totalorder %s23, 1
    %p255 = por %p253, %p254
    %p257 = scmp.ne.s32.totalorder %s240, %s256
    %p258 = scmp.eq.s32.totalorder %s23, 0
    %p259 = por %p257, %p258
    %s260 = ssub.s32 %s17, %s24
    %p261 = scmp.eq.s32.totalorder %s260, 0
    %s263 = sadd.s32 %s262, 1
    %s264 = scalar_select %p261, %s262, %s263
    %p267 = pneg %p261
    %p268 = scmp.eq.s32.totalorder %s17, 1
    %p269 = por %p267, %p268
    %p270 = scmp.ne.s32.totalorder %s262, %s265
    %p271 = scmp.eq.s32.totalorder %s17, 0
    %p272 = por %p270, %p271
    %p273 = scmp.ne.s32.totalorder %s262, %s265
    %p274 = scmp.eq.s32.totalorder %s22, 1
    %p275 = por %p273, %p274
    %p276 = scmp.ne.s32.totalorder %s265, %s266
    %p277 = scmp.eq.s32.totalorder %s22, 0
    %p278 = por %p276, %p277
    %p279 = scmp.ne.s32.totalorder %s265, %s266
    %p280 = scmp.eq.s32.totalorder %s23, 1
    %p281 = por %p279, %p280
    %p283 = scmp.ne.s32.totalorder %s266, %s282
    %p284 = scmp.eq.s32.totalorder %s23, 0
    %p285 = por %p283, %p284
    %p286 = scmp.le.s32.totalorder 1, %s17
    %p287 = scmp.lt.s32.totalorder %s17, 3
    %p288 = pnand %p286, %p287
    %p289 = pneg %p288
    // Predicated region
    $region9: #{_spm32c_core.1} parent=5 // pred_check
      _
    $region10: #{_spm32c_core.1} parent=5 // pred_check_branch
      %291 = sbr.rel (%p288) target = $region12
    $region11: #{_spm32c_core.1} parent=5 // pred_region
      %s292 = ssub.s32 %s17, 1
      // Predicated region
      $region13: #{_spm32c_core.1} parent=11 // pred_check
        %p293 = pneg %p38
      $region14: #{_spm32c_core.1} parent=11 // pred_check_branch
        %295 = sbr.rel (%p293) target = $region16
      $region15: #{_spm32c_core.1} parent=11 // pred_region
        _
      $region16: #{_spm32c_core.1} parent=11 // pred_fallthru
        _
      // Predicated region
      $region17: #{_spm32c_core.1} parent=11 // pred_check
        %p296 = pneg %p137
      $region18: #{_spm32c_core.1} parent=11 // pred_check_branch
        %298 = sbr.rel (%p296) target = $region20
      $region19: #{_spm32c_core.1} parent=11 // pred_region
        _
      $region20: #{_spm32c_core.1} parent=11 // pred_fallthru
        _
      // Predicated region
      $region21: #{_spm32c_core.1} parent=11 // pred_check
        %p299 = pneg %p158
      $region22: #{_spm32c_core.1} parent=11 // pred_check_branch
        %301 = sbr.rel (%p299) target = $region24
      $region23: #{_spm32c_core.1} parent=11 // pred_region
        _
      $region24: #{_spm32c_core.1} parent=11 // pred_fallthru
        _
      // Predicated region
      $region25: #{_spm32c_core.1} parent=11 // pred_check
        %p302 = pneg %p179
      $region26: #{_spm32c_core.1} parent=11 // pred_check_branch
        %304 = sbr.rel (%p302) target = $region28
      $region27: #{_spm32c_core.1} parent=11 // pred_region
        _
      $region28: #{_spm32c_core.1} parent=11 // pred_fallthru
        _
      // Predicated region
      $region29: #{_spm32c_core.1} parent=11 // pred_check
        %p305 = pneg %p200
      $region30: #{_spm32c_core.1} parent=11 // pred_check_branch
        %307 = sbr.rel (%p305) target = $region32
      $region31: #{_spm32c_core.1} parent=11 // pred_region
        _
      $region32: #{_spm32c_core.1} parent=11 // pred_fallthru
        _
    $region12: #{_spm32c_core.1} parent=5 // pred_fallthru
      _
    %p308 = scmp.lt.s32.totalorder %s17, 2
    // Predicated region
    $region33: #{_spm32c_core.1} parent=5 // pred_check
      %p309 = pneg %p308
    $region34: #{_spm32c_core.1} parent=5 // pred_check_branch
      %311 = sbr.rel (%p309) target = $region36
    $region35: #{_spm32c_core.1} parent=5 // pred_region
      // Predicated region
      $region37: #{_spm32c_core.1} parent=35 // pred_check
        %p312 = pneg %p58
      $region38: #{_spm32c_core.1} parent=35 // pred_check_branch
        %314 = sbr.rel (%p312) target = $region40
      $region39: #{_spm32c_core.1} parent=35 // pred_region
        %p315 = scmp.lt.s32.totalorder %s17, 1
        %s316 = scalar_select %p315, %s17, 1
        %s317 = smul.addr %s316, 4
        %s318 = smul.addr %s317, 8
        %s319 = scalar_lea.vmem %s1, %s318
      $region40: #{_spm32c_core.1} parent=35 // pred_fallthru
        _
      // Predicated region
      $region41: #{_spm32c_core.1} parent=35 // pred_check
        %p320 = pneg %p84
      $region42: #{_spm32c_core.1} parent=35 // pred_check_branch
        %322 = sbr.rel (%p320) target = $region44
      $region43: #{_spm32c_core.1} parent=35 // pred_region
        %p323 = scmp.lt.s32.totalorder %s17, 1
        %s324 = scalar_select %p323, %s17, 1
        %s325 = smul.addr %s324, 2
        %s326 = smul.addr %s325, 8
        %s327 = scalar_lea.vmem %s2, %s326
      $region44: #{_spm32c_core.1} parent=35 // pred_fallthru
        _
      // Predicated region
      $region45: #{_spm32c_core.1} parent=35 // pred_check
        %p328 = pneg %p110
      $region46: #{_spm32c_core.1} parent=35 // pred_check_branch
        %330 = sbr.rel (%p328) target = $region48
      $region47: #{_spm32c_core.1} parent=35 // pred_region
        %p331 = scmp.lt.s32.totalorder %s17, 1
        %s332 = scalar_select %p331, %s17, 1
        %s333 = smul.addr %s332, 2
        %s334 = smul.addr %s333, 8
        %s335 = scalar_lea.vmem %s3, %s334
      $region48: #{_spm32c_core.1} parent=35 // pred_fallthru
        _
    $region36: #{_spm32c_core.1} parent=5 // pred_fallthru
      _
    %p336 = scmp.le.s32.totalorder 1, %s17
    %p337 = scmp.lt.s32.totalorder %s17, 3
    %p338 = pnand %p336, %p337
    %p339 = pneg %p338
    // Predicated region
    $region49: #{_spm32c_core.1} parent=5 // pred_check
      _
    $region50: #{_spm32c_core.1} parent=5 // pred_check_branch
      %341 = sbr.rel (%p338) target = $region52
    $region51: #{_spm32c_core.1} parent=5 // pred_region
      %s342 = ssub.s32 %s17, 1
      %p343 = pneg %p38
      %p344 = pneg %p35
      %p345 = scmp.lt.s32.totalorder %s22, 1
      %s346 = scalar_select %p345, %s22, 1
      %s347 = smul.addr %s346, 4
      %s348 = smul.addr %s347, 8
      %s349 = scalar_lea.vmem %s1, %s348
      %p350 = pneg %p64
      %p351 = pneg %p61
      %p352 = scmp.lt.s32.totalorder %s22, 1
      %s353 = scalar_select %p352, %s22, 1
      %s354 = smul.addr %s353, 2
      %s355 = smul.addr %s354, 8
      %s356 = scalar_lea.vmem %s2, %s355
      %p357 = pneg %p90
      %p358 = pneg %p87
      %p359 = scmp.lt.s32.totalorder %s22, 1
      %s360 = scalar_select %p359, %s22, 1
      %s361 = smul.addr %s360, 2
      %s362 = smul.addr %s361, 8
      %s363 = scalar_lea.vmem %s3, %s362
      %p364 = pneg %p116
      %p365 = pneg %p113
      %p366 = pneg %p137
      %p367 = pneg %p134
      %p368 = pneg %p158
      %p369 = pneg %p155
      %p370 = pneg %p179
      %p371 = pneg %p176
      %p372 = pneg %p200
      %p373 = pneg %p197
      %p374 = pneg %p226
      %p375 = pneg %p223
      %p376 = scmp.lt.s32.totalorder %s22, 1
      %s377 = scalar_select %p376, %s22, 1
      %s378 = smul.addr %s377, 4
      %s379 = smul.addr %s378, 8
      %s380 = scalar_lea.vmem %s8, %s379
      %p381 = pneg %p252
      %p382 = pneg %p249
      %p383 = scmp.lt.s32.totalorder %s22, 1
      %s384 = scalar_select %p383, %s22, 1
      %s385 = smul.addr %s384, 2
      %s386 = smul.addr %s385, 8
      %s387 = scalar_lea.vmem %s9, %s386
      %p388 = pneg %p278
      %p389 = pneg %p275
      %p390 = scmp.lt.s32.totalorder %s22, 1
      %s391 = scalar_select %p390, %s22, 1
      %s392 = smul.addr %s391, 2
      %s393 = smul.addr %s392, 8
      %s394 = scalar_lea.vmem %s10, %s393
      %p395 = scmp.lt.s32.totalorder %s22, 1
      %s396 = scalar_select %p395, %s22, 1
      %s397 = smul.addr %s396, 4
      %s398 = smul.addr %s397, 8
      %s399 = scalar_lea.vmem %s1, %s398
      %p400 = scmp.lt.s32.totalorder %s22, 1
      %s401 = scalar_select %p400, %s22, 1
      %s402 = smul.addr %s401, 2
      %s403 = smul.addr %s402, 8
      %s404 = scalar_lea.vmem %s2, %s403
      %p405 = scmp.lt.s32.totalorder %s22, 1
      %s406 = scalar_select %p405, %s22, 1
      %s407 = smul.addr %s406, 2
      %s408 = smul.addr %s407, 8
      %s409 = scalar_lea.vmem %s3, %s408
      %p410 = scmp.lt.s32.totalorder %s22, 1
      %s411 = scalar_select %p410, %s22, 1
      %s412 = smul.addr %s411, 4
      %s413 = smul.addr %s412, 8
      %s414 = scalar_lea.vmem %s8, %s413
      %p415 = scmp.lt.s32.totalorder %s22, 1
      %s416 = scalar_select %p415, %s22, 1
      %s417 = smul.addr %s416, 2
      %s418 = smul.addr %s417, 8
      %s419 = scalar_lea.vmem %s9, %s418
      %p420 = scmp.lt.s32.totalorder %s22, 1
      %s421 = scalar_select %p420, %s22, 1
      %s422 = smul.addr %s421, 2
      %s423 = smul.addr %s422, 8
      %s424 = scalar_lea.vmem %s10, %s423
      %v425 = vld [vmem:[%s0] ss:$8 sm:$0x3]
      %v427 = vperm.slane %v425, 0
      %v428 = vperm.slane %v425, 1
      %s431 = scalar_lea.vmem %s0, 1
      %v432 = vld [vmem:[%s431] ss:$8 sm:$0x3]
      %v434 = vperm.slane %v432, 0
      %v435 = vperm.slane %v432, 1
      %s438 = scalar_lea.vmem %s0, 2
      %v439 = vld [vmem:[%s438] ss:$8 sm:$0x3]
      %v441 = vperm.slane %v439, 0
      %v442 = vperm.slane %v439, 1
      %s445 = scalar_lea.vmem %s0, 3
      %v446 = vld [vmem:[%s445] ss:$8 sm:$0x3]
      %v448 = vperm.slane %v446, 0
      %v449 = vperm.slane %v446, 1
      %s452 = scalar_lea.vmem %s0, 5
      %v453 = vld [vmem:[%s452] ss:$8 sm:$0x3]
      %v455 = vperm.slane %v453, 0
      %v456 = vperm.slane %v453, 1
      %s459 = scalar_lea.vmem %s0, 6
      %v460 = vld [vmem:[%s459] ss:$8 sm:$0x3]
      %v462 = vperm.slane %v460, 0
      %v463 = vperm.slane %v460, 1
      %s466 = scalar_lea.vmem %s0, 7
      %v467 = vld [vmem:[%s466] ss:$8 sm:$0x3]
      %v469 = vperm.slane %v467, 0
      %v470 = vperm.slane %v467, 1
      %s473 = scalar_lea.vmem %s0, 16
      %v474 = vld [vmem:[%s473] ss:$8 sm:$0x3]
      %v476 = vperm.slane %v474, 0
      %v477 = vperm.slane %v474, 1
      %v480 = vld [vmem:[%s399] sm:$0xff]
      %v481 = vld [vmem:[%s399 + $0x8] sm:$0xff]
      %v482 = vld [vmem:[%s399 + $0x10] sm:$0xff]
      %v483 = vld [vmem:[%s399 + $0x18] sm:$0xff]
      %v484 = vld [vmem:[%s404] sm:$0xff]
      %v485 = vld [vmem:[%s404 + $0x8] sm:$0xff]
      %486 = vrot.lane.b32.xlu0 %v480, 17
      %v487 = vpop.permute.xlu0 %486
      %488 = vrot.lane.b32.xlu0 %v482, 17
      %v489 = vpop.permute.xlu0 %488
      %490 = vrot.lane.b32.xlu0 %v484, 17
      %v491 = vpop.permute.xlu0 %490
      %492 = vrot.lane.b32.xlu0 %v481, 17
      %v493 = vpop.permute.xlu0 %492
      %494 = vrot.lane.b32.xlu0 %v483, 17
      %v495 = vpop.permute.xlu0 %494
      %496 = vrot.lane.b32.xlu0 %v485, 17
      %v497 = vpop.permute.xlu0 %496
      %v498 = vlaneseq
      %v499 = vand.u32 %v498, 127
      %vm500 = vcmp.lt.s32.totalorder %v499, 17
      %v501 = vsel %vm500, %v487, %v493
      %v502 = vsel %vm500, %v489, %v495
      %v503 = vsel %vm500, %v491, %v497
      %v504 = vsel %vm500, %v493, %v487
      %v505 = vsel %vm500, %v495, %v489
      %v506 = vsel %vm500, %v497, %v491
      %v507 = vmul.f32 %v504, %v427
      %v508 = vmul.f32 %v501, %v428
      %v509 = vmul.f32 %v505, %v427
      %v510 = vmul.f32 %v502, %v428
      %v511 = vmul.f32 %v506, %v427
      %v512 = vmul.f32 %v503, %v428
      %513 = vst [vmem:[#allocation2] sm:$0xff] %v507
      %514 = vst [vmem:[#allocation2 + $0x8] sm:$0xff] %v508
      %515 = vst [vmem:[#allocation2 + $0x10] sm:$0xff] %v509
      %516 = vst [vmem:[#allocation2 + $0x18] sm:$0xff] %v510
      %517 = vst [vmem:[#allocation2 + $0x20] sm:$0xff] %v511
      %518 = vst [vmem:[#allocation2 + $0x28] sm:$0xff] %v512
      %519 = vrot.lane.b32.xlu0 %v480, 16
      %v520 = vpop.permute.xlu0 %519
      %521 = vrot.lane.b32.xlu0 %v482, 16
      %v522 = vpop.permute.xlu0 %521
      %523 = vrot.lane.b32.xlu0 %v484, 16
      %v524 = vpop.permute.xlu0 %523
      %525 = vrot.lane.b32.xlu0 %v481, 16
      %v526 = vpop.permute.xlu0 %525
      %527 = vrot.lane.b32.xlu0 %v483, 16
      %v528 = vpop.permute.xlu0 %527
      %529 = vrot.lane.b32.xlu0 %v485, 16
      %v530 = vpop.permute.xlu0 %529
      %vm531 = vcmp.lt.s32.totalorder %v499, 16
      %v532 = vsel %vm531, %v520, %v526
      %v533 = vsel %vm531, %v522, %v528
      %v534 = vsel %vm531, %v524, %v530
      %v535 = vsel %vm531, %v526, %v520
      %v536 = vsel %vm531, %v528, %v522
      %v537 = vsel %vm531, %v530, %v524
      %v538 = vmul.f32 %v535, %v434
      %v539 = vmul.f32 %v532, %v435
      %v540 = vmul.f32 %v536, %v434
      %v541 = vmul.f32 %v533, %v435
      %v542 = vmul.f32 %v537, %v434
      %v543 = vmul.f32 %v534, %v435
      %544 = vst [vmem:[#allocation2 + $0x30] sm:$0xff] %v538
      %545 = vst [vmem:[#allocation2 + $0x38] sm:$0xff] %v539
      %546 = vst [vmem:[#allocation2 + $0x40] sm:$0xff] %v540
      %547 = vst [vmem:[#allocation2 + $0x48] sm:$0xff] %v541
      %548 = vst [vmem:[#allocation2 + $0x50] sm:$0xff] %v542
      %549 = vst [vmem:[#allocation2 + $0x58] sm:$0xff] %v543
      %550 = vrot.lane.b32.xlu0 %v480, 15
      %v551 = vpop.permute.xlu0 %550
      %552 = vrot.lane.b32.xlu0 %v482, 15
      %v553 = vpop.permute.xlu0 %552
      %554 = vrot.lane.b32.xlu0 %v484, 15
      %v555 = vpop.permute.xlu0 %554
      %556 = vrot.lane.b32.xlu0 %v481, 15
      %v557 = vpop.permute.xlu0 %556
      %558 = vrot.lane.b32.xlu0 %v483, 15
      %v559 = vpop.permute.xlu0 %558
      %560 = vrot.lane.b32.xlu0 %v485, 15
      %v561 = vpop.permute.xlu0 %560
      %vm562 = vcmp.lt.s32.totalorder %v499, 15
      %v563 = vsel %vm562, %v551, %v557
      %v564 = vsel %vm562, %v553, %v559
      %v565 = vsel %vm562, %v555, %v561
      %v566 = vsel %vm562, %v557, %v551
      %v567 = vsel %vm562, %v559, %v553
      %v568 = vsel %vm562, %v561, %v555
      %v569 = vmul.f32 %v566, %v441
      %v570 = vmul.f32 %v563, %v442
      %v571 = vmul.f32 %v567, %v441
      %v572 = vmul.f32 %v564, %v442
      %v573 = vmul.f32 %v568, %v441
      %v574 = vmul.f32 %v565, %v442
      %575 = vst [vmem:[#allocation2 + $0x60] sm:$0xff] %v569
      %576 = vst [vmem:[#allocation2 + $0x68] sm:$0xff] %v570
      %577 = vst [vmem:[#allocation2 + $0x70] sm:$0xff] %v571
      %578 = vst [vmem:[#allocation2 + $0x78] sm:$0xff] %v572
      %579 = vst [vmem:[#allocation2 + $0x80] sm:$0xff] %v573
      %580 = vst [vmem:[#allocation2 + $0x88] sm:$0xff] %v574
      %581 = vrot.lane.b32.xlu0 %v480, 1
      %v582 = vpop.permute.xlu0 %581
      %583 = vrot.lane.b32.xlu0 %v482, 1
      %v584 = vpop.permute.xlu0 %583
      %585 = vrot.lane.b32.xlu0 %v484, 1
      %v586 = vpop.permute.xlu0 %585
      %587 = vrot.lane.b32.xlu0 %v481, 1
      %v588 = vpop.permute.xlu0 %587
      %589 = vrot.lane.b32.xlu0 %v483, 1
      %v590 = vpop.permute.xlu0 %589
      %591 = vrot.lane.b32.xlu0 %v485, 1
      %v592 = vpop.permute.xlu0 %591
      %vm593 = vcmp.lt.s32.totalorder %v499, 1
      %v594 = vsel %vm593, %v582, %v588
      %v595 = vsel %vm593, %v584, %v590
      %v596 = vsel %vm593, %v586, %v592
      %v597 = vsel %vm593, %v588, %v582
      %v598 = vsel %vm593, %v590, %v584
      %v599 = vsel %vm593, %v592, %v586
      %v600 = vmul.f32 %v597, %v448
      %v601 = vmul.f32 %v594, %v449
      %v602 = vmul.f32 %v598, %v448
      %v603 = vmul.f32 %v595, %v449
      %v604 = vmul.f32 %v599, %v448
      %v605 = vmul.f32 %v596, %v449
      %606 = vst [vmem:[#allocation2 + $0x90] sm:$0xff] %v600
      %607 = vst [vmem:[#allocation2 + $0x98] sm:$0xff] %v601
      %608 = vst [vmem:[#allocation2 + $0xa0] sm:$0xff] %v602
      %609 = vst [vmem:[#allocation2 + $0xa8] sm:$0xff] %v603
      %610 = vst [vmem:[#allocation2 + $0xb0] sm:$0xff] %v604
      %611 = vst [vmem:[#allocation2 + $0xb8] sm:$0xff] %v605
      %612 = vst [vmem:[#allocation2 + $0xc0] sm:$0xff] %v480
      %613 = vst [vmem:[#allocation2 + $0xc8] sm:$0xff] %v481
      %614 = vst [vmem:[#allocation2 + $0xd0] sm:$0xff] %v482
      %615 = vst [vmem:[#allocation2 + $0xd8] sm:$0xff] %v483
      %616 = vst [vmem:[#allocation2 + $0xe0] sm:$0xff] %v484
      %617 = vst [vmem:[#allocation2 + $0xe8] sm:$0xff] %v485
      %618 = vrot.lane.b32.xlu0 %v480, 127
      %v619 = vpop.permute.xlu0 %618
      %620 = vrot.lane.b32.xlu0 %v482, 127
      %v621 = vpop.permute.xlu0 %620
      %622 = vrot.lane.b32.xlu0 %v484, 127
      %v623 = vpop.permute.xlu0 %622
      %624 = vrot.lane.b32.xlu0 %v481, 127
      %v625 = vpop.permute.xlu0 %624
      %626 = vrot.lane.b32.xlu0 %v483, 127
      %v627 = vpop.permute.xlu0 %626
      %628 = vrot.lane.b32.xlu0 %v485, 127
      %v629 = vpop.permute.xlu0 %628
      %vm630 = vcmp.lt.s32.totalorder %v499, 127
      %v631 = vsel %vm630, %v619, %v625
      %v632 = vsel %vm630, %v621, %v627
      %v633 = vsel %vm630, %v623, %v629
      %v634 = vsel %vm630, %v625, %v619
      %v635 = vsel %vm630, %v627, %v621
      %v636 = vsel %vm630, %v629, %v623
      %v637 = vmul.f32 %v631, %v455
      %v638 = vmul.f32 %v634, %v456
      %v639 = vmul.f32 %v632, %v455
      %v640 = vmul.f32 %v635, %v456
      %v641 = vmul.f32 %v633, %v455
      %v642 = vmul.f32 %v636, %v456
      %643 = vst [vmem:[#allocation2 + $0xf0] sm:$0xff] %v637
      %644 = vst [vmem:[#allocation2 + $0xf8] sm:$0xff] %v638
      %645 = vst [vmem:[#allocation2 + $0x100] sm:$0xff] %v639
      %646 = vst [vmem:[#allocation2 + $0x108] sm:$0xff] %v640
      %647 = vst [vmem:[#allocation2 + $0x110] sm:$0xff] %v641
      %648 = vst [vmem:[#allocation2 + $0x118] sm:$0xff] %v642
      %649 = vrot.lane.b32.xlu0 %v480, 113
      %v650 = vpop.permute.xlu0 %649
      %651 = vrot.lane.b32.xlu0 %v482, 113
      %v652 = vpop.permute.xlu0 %651
      %653 = vrot.lane.b32.xlu0 %v484, 113
      %v654 = vpop.permute.xlu0 %653
      %655 = vrot.lane.b32.xlu0 %v481, 113
      %v656 = vpop.permute.xlu0 %655
      %657 = vrot.lane.b32.xlu0 %v483, 113
      %v658 = vpop.permute.xlu0 %657
      %659 = vrot.lane.b32.xlu0 %v485, 113
      %v660 = vpop.permute.xlu0 %659
      %vm661 = vcmp.lt.s32.totalorder %v499, 113
      %v662 = vsel %vm661, %v650, %v656
      %v663 = vsel %vm661, %v652, %v658
      %v664 = vsel %vm661, %v654, %v660
      %v665 = vsel %vm661, %v656, %v650
      %v666 = vsel %vm661, %v658, %v652
      %v667 = vsel %vm661, %v660, %v654
      %v668 = vmul.f32 %v662, %v462
      %v669 = vmul.f32 %v665, %v463
      %v670 = vmul.f32 %v663, %v462
      %v671 = vmul.f32 %v666, %v463
      %v672 = vmul.f32 %v664, %v462
      %v673 = vmul.f32 %v667, %v463
      %674 = vst [vmem:[#allocation2 + $0x120] sm:$0xff] %v668
      %675 = vst [vmem:[#allocation2 + $0x128] sm:$0xff] %v669
      %676 = vst [vmem:[#allocation2 + $0x130] sm:$0xff] %v670
      %677 = vst [vmem:[#allocation2 + $0x138] sm:$0xff] %v671
      %678 = vst [vmem:[#allocation2 + $0x140] sm:$0xff] %v672
      %679 = vst [vmem:[#allocation2 + $0x148] sm:$0xff] %v673
      %680 = vrot.lane.b32.xlu0 %v480, 112
      %v681 = vpop.permute.xlu0 %680
      %682 = vrot.lane.b32.xlu0 %v482, 112
      %v683 = vpop.permute.xlu0 %682
      %684 = vrot.lane.b32.xlu0 %v484, 112
      %v685 = vpop.permute.xlu0 %684
      %686 = vrot.lane.b32.xlu0 %v481, 112
      %v687 = vpop.permute.xlu0 %686
      %688 = vrot.lane.b32.xlu0 %v483, 112
      %v689 = vpop.permute.xlu0 %688
      %690 = vrot.lane.b32.xlu0 %v485, 112
      %v691 = vpop.permute.xlu0 %690
      %vm692 = vcmp.lt.s32.totalorder %v499, 112
      %v693 = vsel %vm692, %v681, %v687
      %v694 = vsel %vm692, %v683, %v689
      %v695 = vsel %vm692, %v685, %v691
      %v696 = vsel %vm692, %v687, %v681
      %v697 = vsel %vm692, %v689, %v683
      %v698 = vsel %vm692, %v691, %v685
      %v699 = vmul.f32 %v693, %v469
      %v700 = vmul.f32 %v696, %v470
      %v701 = vmul.f32 %v694, %v469
      %v702 = vmul.f32 %v697, %v470
      %v703 = vmul.f32 %v695, %v469
      %v704 = vmul.f32 %v698, %v470
      %705 = vst [vmem:[#allocation2 + $0x150] sm:$0xff] %v699
      %706 = vst [vmem:[#allocation2 + $0x158] sm:$0xff] %v700
      %707 = vst [vmem:[#allocation2 + $0x160] sm:$0xff] %v701
      %708 = vst [vmem:[#allocation2 + $0x168] sm:$0xff] %v702
      %709 = vst [vmem:[#allocation2 + $0x170] sm:$0xff] %v703
      %710 = vst [vmem:[#allocation2 + $0x178] sm:$0xff] %v704
      %711 = vrot.lane.b32.xlu0 %v480, 111
      %v712 = vpop.permute.xlu0 %711
      %713 = vrot.lane.b32.xlu0 %v482, 111
      %v714 = vpop.permute.xlu0 %713
      %715 = vrot.lane.b32.xlu0 %v484, 111
      %v716 = vpop.permute.xlu0 %715
      %717 = vrot.lane.b32.xlu0 %v481, 111
      %v718 = vpop.permute.xlu0 %717
      %719 = vrot.lane.b32.xlu0 %v483, 111
      %v720 = vpop.permute.xlu0 %719
      %721 = vrot.lane.b32.xlu0 %v485, 111
      %v722 = vpop.permute.xlu0 %721
      %vm723 = vcmp.lt.s32.totalorder %v499, 111
      %v724 = vsel %vm723, %v712, %v718
      %v725 = vsel %vm723, %v714, %v720
      %v726 = vsel %vm723, %v716, %v722
      %v727 = vsel %vm723, %v718, %v712
      %v728 = vsel %vm723, %v720, %v714
      %v729 = vsel %vm723, %v722, %v716
      %v730 = vmul.f32 %v724, %v476
      %v731 = vmul.f32 %v727, %v477
      %v732 = vmul.f32 %v725, %v476
      %v733 = vmul.f32 %v728, %v477
      %v734 = vmul.f32 %v726, %v476
      %v735 = vmul.f32 %v729, %v477
      %736 = vst [vmem:[#allocation2 + $0x180] sm:$0xff] %v730
      %737 = vst [vmem:[#allocation2 + $0x188] sm:$0xff] %v731
      %738 = vst [vmem:[#allocation2 + $0x190] sm:$0xff] %v732
      %739 = vst [vmem:[#allocation2 + $0x198] sm:$0xff] %v733
      %740 = vst [vmem:[#allocation2 + $0x1a0] sm:$0xff] %v734
      %741 = vst [vmem:[#allocation2 + $0x1a8] sm:$0xff] %v735
      %v742 = vld [vmem:[%s4] sm:$0xff]
      %v743 = vld [vmem:[%s4 + $0x8] sm:$0xff]
      %v744 = vld [vmem:[%s4 + $0x10] sm:$0xff]
      %v745 = vld [vmem:[%s4 + $0x18] sm:$0xff]
      %v746 = vld [vmem:[%s4 + $0x20] sm:$0xff]
      %v747 = vld [vmem:[%s4 + $0x28] sm:$0xff]
      %v748 = vld [vmem:[%s4 + $0x30] sm:$0xff]
      %v749 = vld [vmem:[%s4 + $0x38] sm:$0xff]
      %v750 = vld [vmem:[#allocation2] sm:$0xff]
      %v751 = vld [vmem:[#allocation2 + $0x8] sm:$0xff]
      %v752 = vld [vmem:[#allocation2 + $0x10] sm:$0xff]
      %v753 = vld [vmem:[#allocation2 + $0x18] sm:$0xff]
      %v754 = vld [vmem:[#allocation2 + $0x20] sm:$0xff]
      %v755 = vld [vmem:[#allocation2 + $0x28] sm:$0xff]
      %v756 = vld [vmem:[#allocation2 + $0x30] sm:$0xff]
      %v757 = vld [vmem:[#allocation2 + $0x38] sm:$0xff]
      %v758 = vld [vmem:[#allocation2 + $0x40] sm:$0xff]
      %v759 = vld [vmem:[#allocation2 + $0x48] sm:$0xff]
      %v760 = vld [vmem:[#allocation2 + $0x50] sm:$0xff]
      %v761 = vld [vmem:[#allocation2 + $0x58] sm:$0xff]
      %v762 = vld [vmem:[#allocation2 + $0x60] sm:$0xff]
      %v763 = vld [vmem:[#allocation2 + $0x68] sm:$0xff]
      %v764 = vld [vmem:[#allocation2 + $0x70] sm:$0xff]
      %v765 = vld [vmem:[#allocation2 + $0x78] sm:$0xff]
      %v766 = vld [vmem:[#allocation2 + $0x80] sm:$0xff]
      %v767 = vld [vmem:[#allocation2 + $0x88] sm:$0xff]
      %v768 = vld [vmem:[#allocation2 + $0x90] sm:$0xff]
      %v769 = vld [vmem:[#allocation2 + $0x98] sm:$0xff]
      %v770 = vld [vmem:[#allocation2 + $0xa0] sm:$0xff]
      %v771 = vld [vmem:[#allocation2 + $0xa8] sm:$0xff]
      %v772 = vld [vmem:[#allocation2 + $0xb0] sm:$0xff]
      %v773 = vld [vmem:[#allocation2 + $0xb8] sm:$0xff]
      %v774 = vld [vmem:[#allocation2 + $0xc0] sm:$0xff]
      %v775 = vld [vmem:[#allocation2 + $0xc8] sm:$0xff]
      %v776 = vld [vmem:[#allocation2 + $0xd0] sm:$0xff]
      %v777 = vld [vmem:[#allocation2 + $0xd8] sm:$0xff]
      %v778 = vld [vmem:[#allocation2 + $0xe0] sm:$0xff]
      %v779 = vld [vmem:[#allocation2 + $0xe8] sm:$0xff]
      %v780 = vld [vmem:[#allocation2 + $0xf0] sm:$0xff]
      %v781 = vld [vmem:[#allocation2 + $0xf8] sm:$0xff]
      %v782 = vld [vmem:[#allocation2 + $0x100] sm:$0xff]
      %v783 = vld [vmem:[#allocation2 + $0x108] sm:$0xff]
      %v784 = vld [vmem:[#allocation2 + $0x110] sm:$0xff]
      %v785 = vld [vmem:[#allocation2 + $0x118] sm:$0xff]
      %v786 = vld [vmem:[#allocation2 + $0x120] sm:$0xff]
      %v787 = vld [vmem:[#allocation2 + $0x128] sm:$0xff]
      %v788 = vld [vmem:[#allocation2 + $0x130] sm:$0xff]
      %v789 = vld [vmem:[#allocation2 + $0x138] sm:$0xff]
      %v790 = vld [vmem:[#allocation2 + $0x140] sm:$0xff]
      %v791 = vld [vmem:[#allocation2 + $0x148] sm:$0xff]
      %v792 = vld [vmem:[#allocation2 + $0x150] sm:$0xff]
      %v793 = vld [vmem:[#allocation2 + $0x158] sm:$0xff]
      %v794 = vld [vmem:[#allocation2 + $0x160] sm:$0xff]
      %v795 = vld [vmem:[#allocation2 + $0x168] sm:$0xff]
      %v796 = vld [vmem:[#allocation2 + $0x170] sm:$0xff]
      %v797 = vld [vmem:[#allocation2 + $0x178] sm:$0xff]
      %v798 = vld [vmem:[#allocation2 + $0x180] sm:$0xff]
      %v799 = vld [vmem:[#allocation2 + $0x188] sm:$0xff]
      %v800 = vld [vmem:[#allocation2 + $0x190] sm:$0xff]
      %v801 = vld [vmem:[#allocation2 + $0x198] sm:$0xff]
      %v802 = vld [vmem:[#allocation2 + $0x1a0] sm:$0xff]
      %v803 = vld [vmem:[#allocation2 + $0x1a8] sm:$0xff]
      %v804 = vld [vmem:[%s5] sm:$0xff]
      %v805 = vld [vmem:[%s5 + $0x8] sm:$0xff]
      %v806 = vld [vmem:[%s5 + $0x10] sm:$0xff]
      %v807 = vld [vmem:[%s5 + $0x18] sm:$0xff]
      %809 = vset.pattern.permute.xlu0 0
      %810 = vperm.xlu0 %809, %v804
      %v811 = vpop.permute.xlu0 %810
      %814 = vset.pattern.permute.xlu0 0
      %815 = vperm.xlu0 %814, %v805
      %v816 = vpop.permute.xlu0 %815
      %819 = vset.pattern.permute.xlu0 0
      %820 = vperm.xlu0 %819, %v806
      %v821 = vpop.permute.xlu0 %820
      %824 = vset.pattern.permute.xlu0 0
      %825 = vperm.xlu0 %824, %v807
      %v826 = vpop.permute.xlu0 %825
      %vm828 = vcmask 719872
      %v830 = vsel %vm828, %v743, 0
      %v833 = vsel %vm828, %v745, 0
      %v836 = vsel %vm828, %v747, 0
      %v839 = vsel %vm828, %v749, 0
      %841 = vmatpush.msra.mxu0 %v780
      %842 = vmatpush.msra.mxu0 %v778
      %843 = vmatpush.msra.mxu0 %v776
      %844 = vmatpush.msra.mxu0 %v774
      %845 = vmatpush.msra.mxu0 %v772
      %846 = vmatpush.msra.mxu0 %v770
      %847 = vmatpush.msra.mxu0 %v768
      %848 = vmatpush.msra.mxu0 %v766
      %849 = vmatpush.msra.mxu0 %v764
      %850 = vmatpush.msra.mxu0 %v762
      %851 = vmatpush.msra.mxu0 %v760
      %852 = vmatpush.msra.mxu0 %v758
      %853 = vmatpush.msra.mxu0 %v756
      %854 = vmatpush.msra.mxu0 %v754
      %855 = vmatpush.msra.mxu0 %v752
      %856 = vmatpush.msra.mxu0 %v750
      %857 = vmatmul.f32.gmra.mxu0 %v742
      %v858 = vpop.f32.mrf.mxu0
      %v859 = vadd.f32 %v811, %v858
      %860 = vmatmul.f32.gmra.mxu0 %v744
      %v861 = vpop.f32.mrf.mxu0
      %v862 = vadd.f32 %v816, %v861
      %863 = vmatmul.f32.gmra.mxu0 %v746
      %v864 = vpop.f32.mrf.mxu0
      %v865 = vadd.f32 %v821, %v864
      %866 = vmatmul.f32.gmra.mxu0 %v748
      %v867 = vpop.f32.mrf.mxu0
      %v868 = vadd.f32 %v826, %v867
      %869 = vdwg.mxu0
      %870 = vmatpush.msra.mxu0 0.0
      %871 = vmatpush.msra.mxu0 0.0
      %872 = vmatpush.msra.mxu0 0.0
      %873 = vmatpush.msra.mxu0 0.0
      %874 = vmatpush.msra.mxu0 0.0
      %875 = vmatpush.msra.mxu0 %v802
      %876 = vmatpush.msra.mxu0 %v800
      %877 = vmatpush.msra.mxu0 %v798
      %878 = vmatpush.msra.mxu0 %v796
      %879 = vmatpush.msra.mxu0 %v794
      %880 = vmatpush.msra.mxu0 %v792
      %881 = vmatpush.msra.mxu0 %v790
      %882 = vmatpush.msra.mxu0 %v788
      %883 = vmatpush.msra.mxu0 %v786
      %884 = vmatpush.msra.mxu0 %v784
      %885 = vmatpush.msra.mxu0 %v782
      %886 = vmatmul.f32.gmra.mxu0 %v830
      %v887 = vpop.f32.mrf.mxu0
      %v888 = vadd.f32 %v859, %v887
      %889 = vmatmul.f32.gmra.mxu0 %v833
      %v890 = vpop.f32.mrf.mxu0
      %v891 = vadd.f32 %v862, %v890
      %892 = vmatmul.f32.gmra.mxu0 %v836
      %v893 = vpop.f32.mrf.mxu0
      %v894 = vadd.f32 %v865, %v893
      %895 = vmatmul.f32.gmra.mxu0 %v839
      %v896 = vpop.f32.mrf.mxu0
      %v897 = vadd.f32 %v868, %v896
      %898 = vdwg.mxu0
      %899 = vmatpush.msra.mxu0 %v781
      %900 = vmatpush.msra.mxu0 %v779
      %901 = vmatpush.msra.mxu0 %v777
      %902 = vmatpush.msra.mxu0 %v775
      %903 = vmatpush.msra.mxu0 %v773
      %904 = vmatpush.msra.mxu0 %v771
      %905 = vmatpush.msra.mxu0 %v769
      %906 = vmatpush.msra.mxu0 %v767
      %907 = vmatpush.msra.mxu0 %v765
      %908 = vmatpush.msra.mxu0 %v763
      %909 = vmatpush.msra.mxu0 %v761
      %910 = vmatpush.msra.mxu0 %v759
      %911 = vmatpush.msra.mxu0 %v757
      %912 = vmatpush.msra.mxu0 %v755
      %913 = vmatpush.msra.mxu0 %v753
      %914 = vmatpush.msra.mxu0 %v751
      %915 = vmatmul.f32.gmra.mxu0 %v742
      %v916 = vpop.f32.mrf.mxu0
      %v917 = vadd.f32 %v811, %v916
      %918 = vmatmul.f32.gmra.mxu0 %v744
      %v919 = vpop.f32.mrf.mxu0
      %v920 = vadd.f32 %v816, %v919
      %921 = vmatmul.f32.gmra.mxu0 %v746
      %v922 = vpop.f32.mrf.mxu0
      %v923 = vadd.f32 %v821, %v922
      %924 = vmatmul.f32.gmra.mxu0 %v748
      %v925 = vpop.f32.mrf.mxu0
      %v926 = vadd.f32 %v826, %v925
      %927 = vdwg.mxu0
      %928 = vmatpush.msra.mxu0 0.0
      %929 = vmatpush.msra.mxu0 0.0
      %930 = vmatpush.msra.mxu0 0.0
      %931 = vmatpush.msra.mxu0 0.0
      %932 = vmatpush.msra.mxu0 0.0
      %933 = vmatpush.msra.mxu0 %v803
      %934 = vmatpush.msra.mxu0 %v801
      %935 = vmatpush.msra.mxu0 %v799
      %936 = vmatpush.msra.mxu0 %v797
      %937 = vmatpush.msra.mxu0 %v795
      %938 = vmatpush.msra.mxu0 %v793
      %939 = vmatpush.msra.mxu0 %v791
      %940 = vmatpush.msra.mxu0 %v789
      %941 = vmatpush.msra.mxu0 %v787
      %942 = vmatpush.msra.mxu0 %v785
      %943 = vmatpush.msra.mxu0 %v783
      %944 = vmatmul.f32.gmra.mxu0 %v830
      %v945 = vpop.f32.mrf.mxu0
      %v946 = vadd.f32 %v917, %v945
      %947 = vmatmul.f32.gmra.mxu0 %v833
      %v948 = vpop.f32.mrf.mxu0
      %v949 = vadd.f32 %v920, %v948
      %950 = vmatmul.f32.gmra.mxu0 %v836
      %v951 = vpop.f32.mrf.mxu0
      %v952 = vadd.f32 %v923, %v951
      %953 = vmatmul.f32.gmra.mxu0 %v839
      %v954 = vpop.f32.mrf.mxu0
      %v955 = vadd.f32 %v926, %v954
      %956 = vdwg.mxu0
      %v957 = vxor.u32 %v888, 2147483648
      %v958 = vxor.u32 %v946, 2147483648
      %v959 = vmul.f32 %v957, 1.442695
      %v960 = vpow.pop %v959
      %v961 = vmul.f32 %v958, 1.442695
      %v962 = vpow.pop %v961
      %v963 = vadd.f32 %v960, 1.0
      %v964 = vadd.f32 %v962, 1.0
      %v965 = vrcp.pop %v963
      %v966 = vmul.f32 %v963, %v965
      %v967 = vsub.f32 1.0, %v966
      %v968 = vmul.f32 %v965, %v967
      %v969 = vadd.f32 %v965, %v968
      %vm970 = vweird.f32 %v963
      %vm971 = vweird.f32 %v965
      %vm972 = vmor %vm970, %vm971
      %v973 = vsel %vm972, %v965, %v969
      %v974 = vand.u32 2147483647, %v963
      %vm975 = vcmp.eq.f32.partialorder %v974, 8.507059e+37
      %v976 = vand.u32 %v963, 2147483648
      %v977 = vor.u32 1.1754944e-38, %v976
      %v978 = vsel %vm975, %v977, %v973
      %v979 = vmul.f32 1.0, %v978
      %v980 = vrcp.pop %v964
      %v981 = vmul.f32 %v964, %v980
      %v982 = vsub.f32 1.0, %v981
      %v983 = vmul.f32 %v980, %v982
      %v984 = vadd.f32 %v980, %v983
      %vm985 = vweird.f32 %v964
      %vm986 = vweird.f32 %v980
      %vm987 = vmor %vm985, %vm986
      %v988 = vsel %vm987, %v980, %v984
      %v989 = vand.u32 2147483647, %v964
      %vm990 = vcmp.eq.f32.partialorder %v989, 8.507059e+37
      %v991 = vand.u32 %v964, 2147483648
      %v992 = vor.u32 1.1754944e-38, %v991
      %v993 = vsel %vm990, %v992, %v988
      %v994 = vmul.f32 1.0, %v993
      %v995 = vtanh.pop %v891
      %v996 = vtanh.pop %v949
      %v997 = vxor.u32 %v894, 2147483648
      %v998 = vxor.u32 %v952, 2147483648
      %v999 = vmul.f32 %v997, 1.442695
      %v1000 = vpow.pop %v999
      %v1001 = vmul.f32 %v998, 1.442695
      %v1002 = vpow.pop %v1001
      %v1003 = vadd.f32 %v1000, 1.0
      %v1004 = vadd.f32 %v1002, 1.0
      %v1005 = vrcp.pop %v1003
      %v1006 = vmul.f32 %v1003, %v1005
      %v1007 = vsub.f32 1.0, %v1006
      %v1008 = vmul.f32 %v1005, %v1007
      %v1009 = vadd.f32 %v1005, %v1008
      %vm1010 = vweird.f32 %v1003
      %vm1011 = vweird.f32 %v1005
      %vm1012 = vmor %vm1010, %vm1011
      %v1013 = vsel %vm1012, %v1005, %v1009
      %v1014 = vand.u32 2147483647, %v1003
      %vm1015 = vcmp.eq.f32.partialorder %v1014, 8.507059e+37
      %v1016 = vand.u32 %v1003, 2147483648
      %v1017 = vor.u32 1.1754944e-38, %v1016
      %v1018 = vsel %vm1015, %v1017, %v1013
      %v1019 = vmul.f32 1.0, %v1018
      %v1020 = vrcp.pop %v1004
      %v1021 = vmul.f32 %v1004, %v1020
      %v1022 = vsub.f32 1.0, %v1021
      %v1023 = vmul.f32 %v1020, %v1022
      %v1024 = vadd.f32 %v1020, %v1023
      %vm1025 = vweird.f32 %v1004
      %vm1026 = vweird.f32 %v1020
      %vm1027 = vmor %vm1025, %vm1026
      %v1028 = vsel %vm1027, %v1020, %v1024
      %v1029 = vand.u32 2147483647, %v1004
      %vm1030 = vcmp.eq.f32.partialorder %v1029, 8.507059e+37
      %v1031 = vand.u32 %v1004, 2147483648
      %v1032 = vor.u32 1.1754944e-38, %v1031
      %v1033 = vsel %vm1030, %v1032, %v1028
      %v1034 = vmul.f32 1.0, %v1033
      %vm1035 = vcmp.ge.f32.partialorder %v897, 0.0
      %vm1036 = vcmp.ge.f32.partialorder %v955, 0.0
      %v1037 = vmul.f32 %v897, 0.1
      %v1038 = vmul.f32 %v955, 0.1
      %v1039 = vsel %vm1035, %v897, %v1037
      %v1040 = vsel %vm1036, %v955, %v1038
      %v1041 = vld [vmem:[%s409] sm:$0xff]
      %v1042 = vld [vmem:[%s409 + $0x8] sm:$0xff]
      %v1043 = vmul.f32 %v979, %v995
      %v1044 = vmul.f32 %v994, %v996
      %v1045 = vadd.f32 %v1041, %v1043
      %v1046 = vadd.f32 %v1042, %v1044
      %v1047 = vtanh.pop %v1045
      %v1048 = vtanh.pop %v1046
      %v1049 = vmul.f32 %v1039, %v1047
      %v1050 = vmul.f32 %v1040, %v1048
      %v1051 = vmul.f32 %v1019, %v1045
      %v1052 = vmul.f32 %v1034, %v1046
      %1053 = vst [vmem:[%s419] sm:$0xff] %v1049
      %1054 = vst [vmem:[%s419 + $0x8] sm:$0xff] %v1050
      %1055 = vst [vmem:[%s424] sm:$0xff] %v1051
      %1056 = vst [vmem:[%s424 + $0x8] sm:$0xff] %v1052
      %1057 = vrot.lane.b32.xlu0 %v1049, 17
      %v1058 = vpop.permute.xlu0 %1057
      %1059 = vrot.lane.b32.xlu0 %v1050, 17
      %v1060 = vpop.permute.xlu0 %1059
      %v1061 = vsel %vm500, %v1058, %v1060
      %v1062 = vsel %vm500, %v1060, %v1058
      %v1063 = vmul.f32 %v1062, %v427
      %v1064 = vmul.f32 %v1061, %v428
      %1065 = vst [vmem:[#allocation3] sm:$0xff] %v1063
      %1066 = vst [vmem:[#allocation3 + $0x8] sm:$0xff] %v1064
      %1067 = vrot.lane.b32.xlu0 %v1049, 16
      %v1068 = vpop.permute.xlu0 %1067
      %1069 = vrot.lane.b32.xlu0 %v1050, 16
      %v1070 = vpop.permute.xlu0 %1069
      %v1071 = vsel %vm531, %v1068, %v1070
      %v1072 = vsel %vm531, %v1070, %v1068
      %v1073 = vmul.f32 %v1072, %v434
      %v1074 = vmul.f32 %v1071, %v435
      %1075 = vst [vmem:[#allocation3 + $0x10] sm:$0xff] %v1073
      %1076 = vst [vmem:[#allocation3 + $0x18] sm:$0xff] %v1074
      %1077 = vrot.lane.b32.xlu0 %v1049, 15
      %v1078 = vpop.permute.xlu0 %1077
      %1079 = vrot.lane.b32.xlu0 %v1050, 15
      %v1080 = vpop.permute.xlu0 %1079
      %v1081 = vsel %vm562, %v1078, %v1080
      %v1082 = vsel %vm562, %v1080, %v1078
      %v1083 = vmul.f32 %v1082, %v441
      %v1084 = vmul.f32 %v1081, %v442
      %1085 = vst [vmem:[#allocation3 + $0x20] sm:$0xff] %v1083
      %1086 = vst [vmem:[#allocation3 + $0x28] sm:$0xff] %v1084
      %1087 = vrot.lane.b32.xlu0 %v1049, 1
      %v1088 = vpop.permute.xlu0 %1087
      %1089 = vrot.lane.b32.xlu0 %v1050, 1
      %v1090 = vpop.permute.xlu0 %1089
      %v1091 = vsel %vm593, %v1088, %v1090
      %v1092 = vsel %vm593, %v1090, %v1088
      %v1093 = vmul.f32 %v1092, %v448
      %v1094 = vmul.f32 %v1091, %v449
      %1095 = vst [vmem:[#allocation3 + $0x30] sm:$0xff] %v1093
      %1096 = vst [vmem:[#allocation3 + $0x38] sm:$0xff] %v1094
      %1097 = vst [vmem:[#allocation3 + $0x40] sm:$0xff] %v1049
      %1098 = vst [vmem:[#allocation3 + $0x48] sm:$0xff] %v1050
      %1099 = vrot.lane.b32.xlu0 %v1049, 127
      %v1100 = vpop.permute.xlu0 %1099
      %1101 = vrot.lane.b32.xlu0 %v1050, 127
      %v1102 = vpop.permute.xlu0 %1101
      %v1103 = vsel %vm630, %v1100, %v1102
      %v1104 = vsel %vm630, %v1102, %v1100
      %v1105 = vmul.f32 %v1103, %v455
      %v1106 = vmul.f32 %v1104, %v456
      %1107 = vst [vmem:[#allocation3 + $0x50] sm:$0xff] %v1105
      %1108 = vst [vmem:[#allocation3 + $0x58] sm:$0xff] %v1106
      %1109 = vrot.lane.b32.xlu0 %v1049, 113
      %v1110 = vpop.permute.xlu0 %1109
      %1111 = vrot.lane.b32.xlu0 %v1050, 113
      %v1112 = vpop.permute.xlu0 %1111
      %v1113 = vsel %vm661, %v1110, %v1112
      %v1114 = vsel %vm661, %v1112, %v1110
      %v1115 = vmul.f32 %v1113, %v462
      %v1116 = vmul.f32 %v1114, %v463
      %1117 = vst [vmem:[#allocation3 + $0x60] sm:$0xff] %v1115
      %1118 = vst [vmem:[#allocation3 + $0x68] sm:$0xff] %v1116
      %1119 = vrot.lane.b32.xlu0 %v1049, 112
      %v1120 = vpop.permute.xlu0 %1119
      %1121 = vrot.lane.b32.xlu0 %v1050, 112
      %v1122 = vpop.permute.xlu0 %1121
      %v1123 = vsel %vm692, %v1120, %v1122
      %v1124 = vsel %vm692, %v1122, %v1120
      %v1125 = vmul.f32 %v1123, %v469
      %v1126 = vmul.f32 %v1124, %v470
      %1127 = vst [vmem:[#allocation3 + $0x70] sm:$0xff] %v1125
      %1128 = vst [vmem:[#allocation3 + $0x78] sm:$0xff] %v1126
      %1129 = vrot.lane.b32.xlu0 %v1049, 111
      %v1130 = vpop.permute.xlu0 %1129
      %1131 = vrot.lane.b32.xlu0 %v1050, 111
      %v1132 = vpop.permute.xlu0 %1131
      %v1133 = vsel %vm723, %v1130, %v1132
      %v1134 = vsel %vm723, %v1132, %v1130
      %v1135 = vmul.f32 %v1133, %v476
      %v1136 = vmul.f32 %v1134, %v477
      %1137 = vst [vmem:[#allocation3 + $0x80] sm:$0xff] %v1135
      %1138 = vst [vmem:[#allocation3 + $0x88] sm:$0xff] %v1136
      %v1139 = vld [vmem:[%s6] sm:$0xff]
      %v1140 = vld [vmem:[%s6 + $0x8] sm:$0xff]
      %v1141 = vld [vmem:[#allocation3] sm:$0xff]
      %v1142 = vld [vmem:[#allocation3 + $0x8] sm:$0xff]
      %v1143 = vld [vmem:[#allocation3 + $0x10] sm:$0xff]
      %v1144 = vld [vmem:[#allocation3 + $0x18] sm:$0xff]
      %v1145 = vld [vmem:[#allocation3 + $0x20] sm:$0xff]
      %v1146 = vld [vmem:[#allocation3 + $0x28] sm:$0xff]
      %v1147 = vld [vmem:[#allocation3 + $0x30] sm:$0xff]
      %v1148 = vld [vmem:[#allocation3 + $0x38] sm:$0xff]
      %v1149 = vld [vmem:[#allocation3 + $0x40] sm:$0xff]
      %v1150 = vld [vmem:[#allocation3 + $0x48] sm:$0xff]
      %v1151 = vld [vmem:[#allocation3 + $0x50] sm:$0xff]
      %v1152 = vld [vmem:[#allocation3 + $0x58] sm:$0xff]
      %v1153 = vld [vmem:[#allocation3 + $0x60] sm:$0xff]
      %v1154 = vld [vmem:[#allocation3 + $0x68] sm:$0xff]
      %v1155 = vld [vmem:[#allocation3 + $0x70] sm:$0xff]
      %v1156 = vld [vmem:[#allocation3 + $0x78] sm:$0xff]
      %v1157 = vld [vmem:[#allocation3 + $0x80] sm:$0xff]
      %v1158 = vld [vmem:[#allocation3 + $0x88] sm:$0xff]
      %v1159 = vld [vmem:[%s7] sm:$0xff]
      %v1160 = vld [vmem:[%s7 + $0x8] sm:$0xff]
      %1162 = vset.pattern.permute.xlu0 0
      %1163 = vperm.xlu0 %1162, %v1159
      %v1164 = vpop.permute.xlu0 %1163
      %1167 = vset.pattern.permute.xlu0 0
      %1168 = vperm.xlu0 %1167, %v1160
      %v1169 = vpop.permute.xlu0 %1168
      %vm1171 = vcmask 588800
      %v1173 = vsel %vm1171, %v1139, 0
      %v1176 = vsel %vm1171, %v1140, 0
      %1178 = vmatpush.msra.mxu0 0.0
      %1179 = vmatpush.msra.mxu0 0.0
      %1180 = vmatpush.msra.mxu0 0.0
      %1181 = vmatpush.msra.mxu0 0.0
      %1182 = vmatpush.msra.mxu0 0.0
      %1183 = vmatpush.msra.mxu0 0.0
      %1184 = vmatpush.msra.mxu0 0.0
      %1185 = vmatpush.msra.mxu0 %v1157
      %1186 = vmatpush.msra.mxu0 %v1155
      %1187 = vmatpush.msra.mxu0 %v1153
      %1188 = vmatpush.msra.mxu0 %v1151
      %1189 = vmatpush.msra.mxu0 %v1149
      %1190 = vmatpush.msra.mxu0 %v1147
      %1191 = vmatpush.msra.mxu0 %v1145
      %1192 = vmatpush.msra.mxu0 %v1143
      %1193 = vmatpush.msra.mxu0 %v1141
      %1194 = vmatmul.f32.gmra.mxu0 %v1173
      %v1195 = vpop.f32.mrf.mxu0
      %v1196 = vadd.f32 %v1164, %v1195
      %1197 = vmatmul.f32.gmra.mxu0 %v1176
      %v1198 = vpop.f32.mrf.mxu0
      %v1199 = vadd.f32 %v1169, %v1198
      %1200 = vdwg.mxu0
      %1201 = vmatpush.msra.mxu0 0.0
      %1202 = vmatpush.msra.mxu0 0.0
      %1203 = vmatpush.msra.mxu0 0.0
      %1204 = vmatpush.msra.mxu0 0.0
      %1205 = vmatpush.msra.mxu0 0.0
      %1206 = vmatpush.msra.mxu0 0.0
      %1207 = vmatpush.msra.mxu0 0.0
      %1208 = vmatpush.msra.mxu0 %v1158
      %1209 = vmatpush.msra.mxu0 %v1156
      %1210 = vmatpush.msra.mxu0 %v1154
      %1211 = vmatpush.msra.mxu0 %v1152
      %1212 = vmatpush.msra.mxu0 %v1150
      %1213 = vmatpush.msra.mxu0 %v1148
      %1214 = vmatpush.msra.mxu0 %v1146
      %1215 = vmatpush.msra.mxu0 %v1144
      %1216 = vmatpush.msra.mxu0 %v1142
      %1217 = vmatmul.f32.gmra.mxu0 %v1173
      %v1218 = vpop.f32.mrf.mxu0
      %v1219 = vadd.f32 %v1164, %v1218
      %1220 = vmatmul.f32.gmra.mxu0 %v1176
      %v1221 = vpop.f32.mrf.mxu0
      %v1222 = vadd.f32 %v1169, %v1221
      %1223 = vdwg.mxu0
      %vm1224 = vcmp.ge.f32.partialorder %v1196, 0.0
      %vm1225 = vcmp.ge.f32.partialorder %v1219, 0.0
      %vm1226 = vcmp.ge.f32.partialorder %v1199, 0.0
      %vm1227 = vcmp.ge.f32.partialorder %v1222, 0.0
      %v1228 = vmul.f32 %v1196, 0.1
      %v1229 = vmul.f32 %v1219, 0.1
      %v1230 = vmul.f32 %v1199, 0.1
      %v1231 = vmul.f32 %v1222, 0.1
      %v1232 = vsel %vm1224, %v1196, %v1228
      %v1233 = vsel %vm1225, %v1219, %v1229
      %v1234 = vsel %vm1226, %v1199, %v1230
      %v1235 = vsel %vm1227, %v1222, %v1231
      %1236 = vst [vmem:[%s414] sm:$0xff] %v1232
      %1237 = vst [vmem:[%s414 + $0x8] sm:$0xff] %v1233
      %1238 = vst [vmem:[%s414 + $0x10] sm:$0xff] %v1234
      %1239 = vst [vmem:[%s414 + $0x18] sm:$0xff] %v1235
      %p1240 = scmp.lt.s32.totalorder %s22, 1
      %s1241 = scalar_select %p1240, %s22, 1
      %s1242 = smul.addr %s1241, 4
      %s1243 = smul.addr %s1242, 8
      %s1244 = scalar_lea.vmem %s8, %s1243
      %p1245 = scmp.lt.s32.totalorder %s22, 1
      %s1246 = scalar_select %p1245, %s22, 1
      %s1247 = smul.addr %s1246, 2
      %s1248 = smul.addr %s1247, 8
      %s1249 = scalar_lea.vmem %s9, %s1248
      %p1250 = scmp.lt.s32.totalorder %s22, 1
      %s1251 = scalar_select %p1250, %s22, 1
      %s1252 = smul.addr %s1251, 2
      %s1253 = smul.addr %s1252, 8
      %s1254 = scalar_lea.vmem %s10, %s1253
      // Predicated region
      $region53: #{_spm32c_core.1} parent=51 // pred_check
        %p1255 = pneg %p223
      $region54: #{_spm32c_core.1} parent=51 // pred_check_branch
        %1257 = sbr.rel (%p1255) target = $region56
      $region55: #{_spm32c_core.1} parent=51 // pred_region
        _
      $region56: #{_spm32c_core.1} parent=51 // pred_fallthru
        _
      // Predicated region
      $region57: #{_spm32c_core.1} parent=51 // pred_check
        %p1258 = pneg %p249
      $region58: #{_spm32c_core.1} parent=51 // pred_check_branch
        %1260 = sbr.rel (%p1258) target = $region60
      $region59: #{_spm32c_core.1} parent=51 // pred_region
        _
      $region60: #{_spm32c_core.1} parent=51 // pred_fallthru
        _
      // Predicated region
      $region61: #{_spm32c_core.1} parent=51 // pred_check
        %p1261 = pneg %p275
      $region62: #{_spm32c_core.1} parent=51 // pred_check_branch
        %1263 = sbr.rel (%p1261) target = $region64
      $region63: #{_spm32c_core.1} parent=51 // pred_region
        _
      $region64: #{_spm32c_core.1} parent=51 // pred_fallthru
        _
    $region52: #{_spm32c_core.1} parent=5 // pred_fallthru
      _
    %p1264 = scmp.le.s32.totalorder 2, %s17
    // Predicated region
    $region65: #{_spm32c_core.1} parent=5 // pred_check
      %p1265 = pneg %p1264
    $region66: #{_spm32c_core.1} parent=5 // pred_check_branch
      %1267 = sbr.rel (%p1265) target = $region68
    $region67: #{_spm32c_core.1} parent=5 // pred_region
      %s1268 = ssub.s32 %s17, 2
      // Predicated region
      $region69: #{_spm32c_core.1} parent=67 // pred_check
        %p1269 = pneg %p229
      $region70: #{_spm32c_core.1} parent=67 // pred_check_branch
        %1271 = sbr.rel (%p1269) target = $region72
      $region71: #{_spm32c_core.1} parent=67 // pred_region
        %p1272 = scmp.lt.s32.totalorder %s23, 1
        %s1273 = scalar_select %p1272, %s23, 1
        %s1274 = smul.addr %s1273, 4
        %s1275 = smul.addr %s1274, 8
        %s1276 = scalar_lea.vmem %s8, %s1275
      $region72: #{_spm32c_core.1} parent=67 // pred_fallthru
        _
      // Predicated region
      $region73: #{_spm32c_core.1} parent=67 // pred_check
        %p1277 = pneg %p255
      $region74: #{_spm32c_core.1} parent=67 // pred_check_branch
        %1279 = sbr.rel (%p1277) target = $region76
      $region75: #{_spm32c_core.1} parent=67 // pred_region
        %p1280 = scmp.lt.s32.totalorder %s23, 1
        %s1281 = scalar_select %p1280, %s23, 1
        %s1282 = smul.addr %s1281, 2
        %s1283 = smul.addr %s1282, 8
        %s1284 = scalar_lea.vmem %s9, %s1283
      $region76: #{_spm32c_core.1} parent=67 // pred_fallthru
        _
      // Predicated region
      $region77: #{_spm32c_core.1} parent=67 // pred_check
        %p1285 = pneg %p281
      $region78: #{_spm32c_core.1} parent=67 // pred_check_branch
        %1287 = sbr.rel (%p1285) target = $region80
      $region79: #{_spm32c_core.1} parent=67 // pred_region
        %p1288 = scmp.lt.s32.totalorder %s23, 1
        %s1289 = scalar_select %p1288, %s23, 1
        %s1290 = smul.addr %s1289, 2
        %s1291 = smul.addr %s1290, 8
        %s1292 = scalar_lea.vmem %s10, %s1291
      $region80: #{_spm32c_core.1} parent=67 // pred_fallthru
        _
    $region68: #{_spm32c_core.1} parent=5 // pred_fallthru
      _
  $region6: #{_spm32c_core.1} parent=0 // loop_footer
    %s21 = sadd.s32 1, %s17
  $region7: #{_spm32c_core.1} parent=0 // loop_footer_branch
    %16 = sbr.rel target = $region3
  $region8: #{_spm32c_core.1} parent=0 // loop_exit
    _

</llo_original>
